<compile_context>
chip_gen: v7x
topology: tpu7x:2x2x1
jax: 0.10.0
libtpu: 0.0.40
codegen_flags: <defaults>
</compile_context>

<pallas_src>
import jax
import jax.numpy as jnp
import numpy as np
from jax.experimental import pallas as pl
from jax.experimental.pallas import tpu as pltpu


def _round_up(x, m):
    return (x + m - 1) // m * m


def basic_block_forward(x_nchw, w1_oihw, scale1, shift1, w2_oihw, scale2,
                        shift2, W_lin, W_pred, *, batch_splits=1):
    """BasicBlock forward.  Conv weights OIHW; linear weights (out, in)."""
    N, Cin, H, W = x_nchw.shape
    Cout = w1_oihw.shape[0]
    assert Cin == Cout, "downsample=None requires in_channels == out_channels"
    NC = W_pred.shape[0]
    HW = H * W
    assert HW % 128 == 0, "flattened spatial axis must be lane-aligned"
    assert N % batch_splits == 0
    G = batch_splits                 # grid steps (use 2 on v7x when N >= 2)
    NB = N // G                      # samples handled per grid step
    L = NB * HW                      # lanes per grid step (batch folded in)
    NC_pad = _round_up(NC, 128)      # lane-dense aux-pred output
    SLOT = _round_up(Cin, 16)        # bf16 sublane packing: 16 rows per tile

    # ---- one-time weight repacking (tiny) ----
    # OIHW -> (O, kh, kw, I) -> (O, 9, SLOT) with zero-padded input channels
    # -> (O, 9*SLOT).  Row order matches the im2col scratch (tap-major,
    # channel-minor within a 16-row-aligned slot).  bf16 for the MXU.
    def pack_w(w):
        o, i = w.shape[0], w.shape[1]
        wt = jnp.transpose(w, (0, 2, 3, 1)).reshape(o, 9, i).astype(jnp.float32)
        wt = jnp.zeros((o, 9, SLOT), jnp.float32).at[:, :, :i].set(wt)
        return wt.reshape(o, 9 * SLOT).astype(jnp.bfloat16)

    w1_mat = pack_w(w1_oihw)
    w2_mat = pack_w(w2_oihw)
    # merged BN affine params: columns = [scale1, shift1, scale2, shift2]
    sb_pack = jnp.stack([scale1, shift1, scale2, shift2],
                        axis=1).astype(jnp.float32)               # (Cout, 4)
    wlin = W_lin.astype(jnp.float32)                              # (C, C)
    wpred_t = jnp.zeros((Cout, NC_pad), jnp.float32).at[:, :NC].set(W_pred.T)

    # Free reshape (NCHW is contiguous): no extra HBM pass over the activation.
    x_flat = x_nchw.reshape(N, Cin, HW).astype(jnp.float32)

    def kernel(x_ref, w1_ref, w2_ref, sb_ref, wlin_ref, wpredt_ref,
               out_ref, pred_ref, col_ref):
        # lane-position masks, in per-sample-local coordinates so the roll on
        # the concatenated (batch-folded) lane axis never leaks across samples
        pos = jax.lax.broadcasted_iota(jnp.int32, (1, L), 1)
        if (HW & (HW - 1)) == 0:
            lp = jnp.bitwise_and(pos, HW - 1)          # pos % HW
        else:
            lp = jax.lax.rem(pos, jnp.int32(HW))
        if (W & (W - 1)) == 0:
            ww = jnp.bitwise_and(lp, W - 1)            # lp % W
        else:
            ww = jax.lax.rem(lp, jnp.int32(W))

        # 3x3 / pad=1 taps: static circular roll + minimal lane mask
        taps = []
        for dh in (-1, 0, 1):
            for dw in (-1, 0, 1):
                shift = dh * W + dw
                m = None
                if dh == -1:
                    m = lp >= W
                elif dh == 1:
                    m = lp < HW - W
                if dw == -1:
                    c = ww >= 1
                    m = c if m is None else m & c
                elif dw == 1:
                    c = ww < W - 1
                    m = c if m is None else m & c
                taps.append((shift, m))                # center tap: m is None

        pad_rows = SLOT - Cin
        zero_pad = (jnp.zeros((pad_rows, L), jnp.float32)
                    if pad_rows > 0 else None)

        def conv3x3(a_cat, w_ref):
            # a_cat: (Cin, L) f32, batch-folded activation (channels on
            # sublanes, N*HW on lanes).  Zero-pad channels to the 16-row slot
            # so every tap store is a full unmasked slab.
            a_pad = (a_cat if zero_pad is None
                     else jnp.concatenate([a_cat, zero_pad], axis=0))
            for t, (shift, m) in enumerate(taps):
                piece = (a_pad if shift == 0
                         else pltpu.roll(a_pad, (-shift) % L, 1))
                if m is not None:
                    piece = jnp.where(m, piece, 0.0)
                col_ref[t * SLOT:(t + 1) * SLOT, :] = piece.astype(jnp.bfloat16)
            # one MXU matmul per conv for the whole batch group:
            # (Cout, 9*SLOT) x (9*SLOT, N*HW), bf16 in, f32 accumulation
            return jnp.dot(w_ref[...], col_ref[...],
                           preferred_element_type=jnp.float32)

        # batch-folded input (lane concat at 128-aligned offsets)
        if NB == 1:
            x_cat = x_ref[0]
        else:
            x_cat = jnp.concatenate([x_ref[n] for n in range(NB)], axis=1)

        sbv = sb_ref[...]                               # (Cout, 4)
        s1 = sbv[:, 0:1]
        b1 = sbv[:, 1:2]
        s2 = sbv[:, 2:3]
        b2 = sbv[:, 3:4]

        # conv1 -> bn1 (folded affine) -> relu
        h1 = jnp.maximum(conv3x3(x_cat, w1_ref) * s1 + b1, 0.0)
        # conv2 -> bn2 (pre-relu, pre-residual)
        out2 = conv3x3(h1, w2_ref) * s2 + b2

        # ---- DeepExplanation + residual, per sample in the group ----
        for n in range(NB):
            xn = x_ref[n]                               # identity, (Cin, HW)
            o2n = out2[:, n * HW:(n + 1) * HW]          # (Cout, HW)
            x_sq = jnp.mean(xn, axis=1, keepdims=True)  # GAP, (C, 1)
            xn_sq = jnp.mean(o2n, axis=1, keepdims=True)
            s_col = jnp.maximum(x_sq + xn_sq, 0.0)
            s_lin = jnp.dot(wlin_ref[...], s_col,
                            preferred_element_type=jnp.float32)   # self.W(s)
            gate = jax.nn.sigmoid(s_lin)                           # (C, 1)
            # pred_fc as a lane-dense row: sum_c s_lin[c] * W_pred^T[c, :]
            pred = jnp.sum(s_lin * wpredt_ref[...], axis=0, keepdims=True)
            out_ref[n] = jnp.maximum(o2n + xn * gate, 0.0)
            pred_ref[n] = pred

    def whole(shape):
        zeros = (0,) * len(shape)
        return pl.BlockSpec(shape, lambda g, _z=zeros: _z)

    out_flat, pred_pad = pl.pallas_call(
        kernel,
        out_shape=(jax.ShapeDtypeStruct((N, Cout, HW), jnp.float32),
                   jax.ShapeDtypeStruct((N, 1, NC_pad), jnp.float32)),
        grid_spec=pltpu.PrefetchScalarGridSpec(
            num_scalar_prefetch=0,
            grid=(G,),
            in_specs=[
                pl.BlockSpec((NB, Cin, HW), lambda g: (g, 0, 0)),
                whole((Cout, 9 * SLOT)),
                whole((Cout, 9 * SLOT)),
                whole((Cout, 4)),
                whole((Cout, Cout)),
                whole((Cout, NC_pad)),
            ],
            out_specs=[
                pl.BlockSpec((NB, Cout, HW), lambda g: (g, 0, 0)),
                pl.BlockSpec((NB, 1, NC_pad), lambda g: (g, 0, 0)),
            ],
            scratch_shapes=[pltpu.VMEM((9 * SLOT, L), jnp.bfloat16)],
        ),
        compiler_params=pltpu.CompilerParams(
            dimension_semantics=("parallel",)),
    )(x_flat, w1_mat, w2_mat, sb_pack, wlin, wpred_t)

    out_nchw = out_flat.reshape(N, Cout, H, W)
    pred = pred_pad[:, 0, :NC]
    # pred_ = 0.0 (input is a plain tensor) => returned prediction is deep_pred
    return out_nchw, pred


def reference_forward(x, w1_oihw, scale1, shift1, w2_oihw, scale2, shift2,
                      W_lin, W_pred):
    """Plain-JAX reference (NCHW, PyTorch weight layouts)."""
    dn = ('NCHW', 'OIHW', 'NCHW')
    out = jax.lax.conv_general_dilated(x, w1_oihw, (1, 1), 'SAME',
                                       dimension_numbers=dn,
                                       precision=jax.lax.Precision.HIGHEST)
    out = out * scale1[None, :, None, None] + shift1[None, :, None, None]
    out = jnp.maximum(out, 0.0)
    out = jax.lax.conv_general_dilated(out, w2_oihw, (1, 1), 'SAME',
                                       dimension_numbers=dn,
                                       precision=jax.lax.Precision.HIGHEST)
    out = out * scale2[None, :, None, None] + shift2[None, :, None, None]
    identity = x
    x_sq = jnp.mean(identity, axis=(2, 3))
    xn_sq = jnp.mean(out, axis=(2, 3))
    s = jnp.maximum(x_sq + xn_sq, 0.0)
    s_lin = s @ W_lin.T
    gate = jax.nn.sigmoid(s_lin)[:, :, None, None]
    identity_g = identity * gate
    pred = s_lin @ W_pred.T
    out = jnp.maximum(out + identity_g, 0.0)
    return out, pred


if __name__ == "__main__":
    key = jax.random.PRNGKey(0)
    kx, kp = jax.random.split(key)
    N, C, Hs, Ws, NC = 2, 4, 16, 16, 11
    x = jax.random.normal(kx, (N, C, Hs, Ws), jnp.float32)

    ks = jax.random.split(kp, 12)
    eps = 1e-5
    # Conv weights in PyTorch OIHW layout
    w1_oihw = 0.1 * jax.random.normal(ks[0], (C, C, 3, 3), jnp.float32)
    w2_oihw = 0.1 * jax.random.normal(ks[1], (C, C, 3, 3), jnp.float32)
    # BatchNorm params (inference mode)
    g1 = 1.0 + 0.1 * jax.random.normal(ks[2], (C,), jnp.float32)
    b1 = 0.1 * jax.random.normal(ks[3], (C,), jnp.float32)
    m1 = 0.1 * jax.random.normal(ks[4], (C,), jnp.float32)
    v1 = jax.random.uniform(ks[5], (C,), jnp.float32, 0.5, 1.5)
    g2 = 1.0 + 0.1 * jax.random.normal(ks[6], (C,), jnp.float32)
    b2 = 0.1 * jax.random.normal(ks[7], (C,), jnp.float32)
    m2 = 0.1 * jax.random.normal(ks[8], (C,), jnp.float32)
    v2 = jax.random.uniform(ks[9], (C,), jnp.float32, 0.5, 1.5)
    # Linear layers in PyTorch (out_features, in_features) layout, bias=False
    W_lin = 0.2 * jax.random.normal(ks[10], (C, C), jnp.float32)    # nn.Linear(C, C)
    W_pred = 0.2 * jax.random.normal(ks[11], (NC, C), jnp.float32)  # nn.Linear(C, NC)

    scale1 = g1 / jnp.sqrt(v1 + eps)
    shift1 = b1 - m1 * scale1
    scale2 = g2 / jnp.sqrt(v2 + eps)
    shift2 = b2 - m2 * scale2

    out, pred = basic_block_forward(x, w1_oihw, scale1, shift1,
                                    w2_oihw, scale2, shift2, W_lin, W_pred,
                                    batch_splits=1)
    out = jax.block_until_ready(out)
    pred = jax.block_until_ready(pred)

    ref_out, ref_pred = reference_forward(x, w1_oihw, scale1, shift1,
                                          w2_oihw, scale2, shift2,
                                          W_lin, W_pred)
    assert np.allclose(np.asarray(out), np.asarray(ref_out),
                       atol=2e-2, rtol=2e-2), "out mismatch vs reference"
    assert np.allclose(np.asarray(pred), np.asarray(ref_pred),
                       atol=2e-2, rtol=2e-2), "pred mismatch vs reference"
    print("KERNEL_OK")
</pallas_src>

<mosaic_0001>
module attributes {stable_mosaic.version = 11 : i64} {
  func.func @kernel(%arg0: i32, %arg1: memref<2x4x256xf32, #tpu.memory_space<vmem>>, %arg2: memref<4x144xbf16, #tpu.memory_space<vmem>>, %arg3: memref<4x144xbf16, #tpu.memory_space<vmem>>, %arg4: memref<4x4xf32, #tpu.memory_space<vmem>>, %arg5: memref<4x4xf32, #tpu.memory_space<vmem>>, %arg6: memref<4x128xf32, #tpu.memory_space<vmem>>, %arg7: memref<2x4x256xf32, #tpu.memory_space<vmem>>, %arg8: memref<2x1x128xf32, #tpu.memory_space<vmem>>, %arg9: memref<144x512xbf16, #tpu.memory_space<vmem>>) attributes {dimension_semantics = [#tpu.dimension_semantics<parallel>], iteration_bounds = array<i64: 1>, scalar_prefetch = 0 : i64, scratch_operands = 1 : i64, tpu.core_type = #tpu.core_type<tc>, window_params = [{transform_indices = @transform_0, window_bounds = array<i64: 2, 4, 256>}, {pipeline_mode = #tpu.pipeline_mode<synchronous>, transform_indices = @transform_1, window_bounds = array<i64: 4, 144>}, {pipeline_mode = #tpu.pipeline_mode<synchronous>, transform_indices = @transform_2, window_bounds = array<i64: 4, 144>}, {pipeline_mode = #tpu.pipeline_mode<synchronous>, transform_indices = @transform_3, window_bounds = array<i64: 4, 4>}, {pipeline_mode = #tpu.pipeline_mode<synchronous>, transform_indices = @transform_4, window_bounds = array<i64: 4, 4>}, {pipeline_mode = #tpu.pipeline_mode<synchronous>, transform_indices = @transform_5, window_bounds = array<i64: 4, 128>}, {transform_indices = @transform_6, window_bounds = array<i64: 2, 4, 256>}, {transform_indices = @transform_7, window_bounds = array<i64: 2, 1, 128>}]} {
    %0 = tpu.iota {dimensions = array<i32: 1>} : vector<1x512xi32>
    %c255_i32 = arith.constant 255 : i32
    %1 = vector.broadcast %c255_i32 : i32 to vector<1x512xi32>
    %2 = arith.andi %0, %1 : vector<1x512xi32>
    %c15_i32 = arith.constant 15 : i32
    %3 = vector.broadcast %c15_i32 : i32 to vector<1x512xi32>
    %4 = arith.andi %2, %3 : vector<1x512xi32>
    %c16_i32 = arith.constant 16 : i32
    %5 = vector.broadcast %c16_i32 : i32 to vector<1x512xi32>
    %6 = arith.cmpi sge, %2, %5 : vector<1x512xi32>
    %c1_i32 = arith.constant 1 : i32
    %7 = vector.broadcast %c1_i32 : i32 to vector<1x512xi32>
    %8 = arith.cmpi sge, %4, %7 : vector<1x512xi32>
    %9 = arith.andi %6, %8 : vector<1x512xi1>
    %c16_i32_0 = arith.constant 16 : i32
    %10 = vector.broadcast %c16_i32_0 : i32 to vector<1x512xi32>
    %11 = arith.cmpi sge, %2, %10 : vector<1x512xi32>
    %c16_i32_1 = arith.constant 16 : i32
    %12 = vector.broadcast %c16_i32_1 : i32 to vector<1x512xi32>
    %13 = arith.cmpi sge, %2, %12 : vector<1x512xi32>
    %c15_i32_2 = arith.constant 15 : i32
    %14 = vector.broadcast %c15_i32_2 : i32 to vector<1x512xi32>
    %15 = arith.cmpi slt, %4, %14 : vector<1x512xi32>
    %16 = arith.andi %13, %15 : vector<1x512xi1>
    %c1_i32_3 = arith.constant 1 : i32
    %17 = vector.broadcast %c1_i32_3 : i32 to vector<1x512xi32>
    %18 = arith.cmpi sge, %4, %17 : vector<1x512xi32>
    %c15_i32_4 = arith.constant 15 : i32
    %19 = vector.broadcast %c15_i32_4 : i32 to vector<1x512xi32>
    %20 = arith.cmpi slt, %4, %19 : vector<1x512xi32>
    %c240_i32 = arith.constant 240 : i32
    %21 = vector.broadcast %c240_i32 : i32 to vector<1x512xi32>
    %22 = arith.cmpi slt, %2, %21 : vector<1x512xi32>
    %c1_i32_5 = arith.constant 1 : i32
    %23 = vector.broadcast %c1_i32_5 : i32 to vector<1x512xi32>
    %24 = arith.cmpi sge, %4, %23 : vector<1x512xi32>
    %25 = arith.andi %22, %24 : vector<1x512xi1>
    %c240_i32_6 = arith.constant 240 : i32
    %26 = vector.broadcast %c240_i32_6 : i32 to vector<1x512xi32>
    %27 = arith.cmpi slt, %2, %26 : vector<1x512xi32>
    %c240_i32_7 = arith.constant 240 : i32
    %28 = vector.broadcast %c240_i32_7 : i32 to vector<1x512xi32>
    %29 = arith.cmpi slt, %2, %28 : vector<1x512xi32>
    %c15_i32_8 = arith.constant 15 : i32
    %30 = vector.broadcast %c15_i32_8 : i32 to vector<1x512xi32>
    %31 = arith.cmpi slt, %4, %30 : vector<1x512xi32>
    %32 = arith.andi %29, %31 : vector<1x512xi1>
    %cst = arith.constant 0.000000e+00 : f32
    %33 = vector.broadcast %cst : f32 to vector<12x512xf32>
    %c0 = arith.constant 0 : index
    %c0_9 = arith.constant 0 : index
    %c0_10 = arith.constant 0 : index
    %34 = vector.load %arg1[%c0, %c0_9, %c0_10] : memref<2x4x256xf32, #tpu.memory_space<vmem>>, vector<1x4x256xf32>
    %35 = vector.shape_cast %34 : vector<1x4x256xf32> to vector<4x256xf32>
    %c1 = arith.constant 1 : index
    %c0_11 = arith.constant 0 : index
    %c0_12 = arith.constant 0 : index
    %36 = vector.load %arg1[%c1, %c0_11, %c0_12] : memref<2x4x256xf32, #tpu.memory_space<vmem>>, vector<1x4x256xf32>
    %37 = vector.shape_cast %36 : vector<1x4x256xf32> to vector<4x256xf32>
    %38 = tpu.concatenate %35, %37 in 1 : vector<4x256xf32>, vector<4x256xf32> -> vector<4x512xf32>
    %c0_13 = arith.constant 0 : index
    %c0_14 = arith.constant 0 : index
    %39 = vector.load %arg4[%c0_13, %c0_14] : memref<4x4xf32, #tpu.memory_space<vmem>>, vector<4x4xf32>
    %40 = vector.extract_strided_slice %39 {offsets = [0, 0], sizes = [4, 1], strides = [1, 1]} : vector<4x4xf32> to vector<4x1xf32>
    %41 = vector.extract_strided_slice %39 {offsets = [0, 1], sizes = [4, 1], strides = [1, 1]} : vector<4x4xf32> to vector<4x1xf32>
    %42 = vector.extract_strided_slice %39 {offsets = [0, 2], sizes = [4, 1], strides = [1, 1]} : vector<4x4xf32> to vector<4x1xf32>
    %43 = vector.extract_strided_slice %39 {offsets = [0, 3], sizes = [4, 1], strides = [1, 1]} : vector<4x4xf32> to vector<4x1xf32>
    %44 = tpu.concatenate %38, %33 in 0 : vector<4x512xf32>, vector<12x512xf32> -> vector<16x512xf32>
    %c17_i32 = arith.constant 17 : i32
    %45 = tpu.dynamic_rotate %44 by %c17_i32 dim 1 : vector<16x512xf32>, i32 -> vector<16x512xf32>
    %cst_15 = arith.constant 0.000000e+00 : f32
    %46 = vector.shape_cast %9 : vector<1x512xi1> to vector<1x512xi1>
    %47 = vector.broadcast %46 : vector<1x512xi1> to vector<16x512xi1>
    %48 = vector.broadcast %cst_15 : f32 to vector<16x512xf32>
    %49 = arith.select %47, %45, %48 : vector<16x512xi1>, vector<16x512xf32>
    %50 = arith.truncf %49 : vector<16x512xf32> to vector<16x512xbf16>
    %c0_16 = arith.constant 0 : index
    %c0_17 = arith.constant 0 : index
    %51 = vector.load %arg9[%c0_16, %c0_17] : memref<144x512xbf16, #tpu.memory_space<vmem>>, vector<16x512xbf16>
    tpu.vector_store %arg9[%c0_16, %c0_17], %50 {strides = array<i32>} : memref<144x512xbf16, #tpu.memory_space<vmem>>, vector<16x512xbf16>,
    %c16_i32_18 = arith.constant 16 : i32
    %52 = tpu.dynamic_rotate %44 by %c16_i32_18 dim 1 : vector<16x512xf32>, i32 -> vector<16x512xf32>
    %cst_19 = arith.constant 0.000000e+00 : f32
    %53 = vector.shape_cast %11 : vector<1x512xi1> to vector<1x512xi1>
    %54 = vector.broadcast %53 : vector<1x512xi1> to vector<16x512xi1>
    %55 = vector.broadcast %cst_19 : f32 to vector<16x512xf32>
    %56 = arith.select %54, %52, %55 : vector<16x512xi1>, vector<16x512xf32>
    %57 = arith.truncf %56 : vector<16x512xf32> to vector<16x512xbf16>
    %c16 = arith.constant 16 : index
    %c0_20 = arith.constant 0 : index
    %58 = vector.load %arg9[%c16, %c0_20] : memref<144x512xbf16, #tpu.memory_space<vmem>>, vector<16x512xbf16>
    tpu.vector_store %arg9[%c16, %c0_20], %57 {strides = array<i32>} : memref<144x512xbf16, #tpu.memory_space<vmem>>, vector<16x512xbf16>,
    %c15_i32_21 = arith.constant 15 : i32
    %59 = tpu.dynamic_rotate %44 by %c15_i32_21 dim 1 : vector<16x512xf32>, i32 -> vector<16x512xf32>
    %cst_22 = arith.constant 0.000000e+00 : f32
    %60 = vector.shape_cast %16 : vector<1x512xi1> to vector<1x512xi1>
    %61 = vector.broadcast %60 : vector<1x512xi1> to vector<16x512xi1>
    %62 = vector.broadcast %cst_22 : f32 to vector<16x512xf32>
    %63 = arith.select %61, %59, %62 : vector<16x512xi1>, vector<16x512xf32>
    %64 = arith.truncf %63 : vector<16x512xf32> to vector<16x512xbf16>
    %c32 = arith.constant 32 : index
    %c0_23 = arith.constant 0 : index
    %65 = vector.load %arg9[%c32, %c0_23] : memref<144x512xbf16, #tpu.memory_space<vmem>>, vector<16x512xbf16>
    tpu.vector_store %arg9[%c32, %c0_23], %64 {strides = array<i32>} : memref<144x512xbf16, #tpu.memory_space<vmem>>, vector<16x512xbf16>,
    %c1_i32_24 = arith.constant 1 : i32
    %66 = tpu.dynamic_rotate %44 by %c1_i32_24 dim 1 : vector<16x512xf32>, i32 -> vector<16x512xf32>
    %cst_25 = arith.constant 0.000000e+00 : f32
    %67 = vector.shape_cast %18 : vector<1x512xi1> to vector<1x512xi1>
    %68 = vector.broadcast %67 : vector<1x512xi1> to vector<16x512xi1>
    %69 = vector.broadcast %cst_25 : f32 to vector<16x512xf32>
    %70 = arith.select %68, %66, %69 : vector<16x512xi1>, vector<16x512xf32>
    %71 = arith.truncf %70 : vector<16x512xf32> to vector<16x512xbf16>
    %c48 = arith.constant 48 : index
    %c0_26 = arith.constant 0 : index
    %72 = vector.load %arg9[%c48, %c0_26] : memref<144x512xbf16, #tpu.memory_space<vmem>>, vector<16x512xbf16>
    tpu.vector_store %arg9[%c48, %c0_26], %71 {strides = array<i32>} : memref<144x512xbf16, #tpu.memory_space<vmem>>, vector<16x512xbf16>,
    %73 = arith.truncf %44 : vector<16x512xf32> to vector<16x512xbf16>
    %c64 = arith.constant 64 : index
    %c0_27 = arith.constant 0 : index
    %74 = vector.load %arg9[%c64, %c0_27] : memref<144x512xbf16, #tpu.memory_space<vmem>>, vector<16x512xbf16>
    tpu.vector_store %arg9[%c64, %c0_27], %73 {strides = array<i32>} : memref<144x512xbf16, #tpu.memory_space<vmem>>, vector<16x512xbf16>,
    %c511_i32 = arith.constant 511 : i32
    %75 = tpu.dynamic_rotate %44 by %c511_i32 dim 1 : vector<16x512xf32>, i32 -> vector<16x512xf32>
    %cst_28 = arith.constant 0.000000e+00 : f32
    %76 = vector.shape_cast %20 : vector<1x512xi1> to vector<1x512xi1>
    %77 = vector.broadcast %76 : vector<1x512xi1> to vector<16x512xi1>
    %78 = vector.broadcast %cst_28 : f32 to vector<16x512xf32>
    %79 = arith.select %77, %75, %78 : vector<16x512xi1>, vector<16x512xf32>
    %80 = arith.truncf %79 : vector<16x512xf32> to vector<16x512xbf16>
    %c80 = arith.constant 80 : index
    %c0_29 = arith.constant 0 : index
    %81 = vector.load %arg9[%c80, %c0_29] : memref<144x512xbf16, #tpu.memory_space<vmem>>, vector<16x512xbf16>
    tpu.vector_store %arg9[%c80, %c0_29], %80 {strides = array<i32>} : memref<144x512xbf16, #tpu.memory_space<vmem>>, vector<16x512xbf16>,
    %c497_i32 = arith.constant 497 : i32
    %82 = tpu.dynamic_rotate %44 by %c497_i32 dim 1 : vector<16x512xf32>, i32 -> vector<16x512xf32>
    %cst_30 = arith.constant 0.000000e+00 : f32
    %83 = vector.shape_cast %25 : vector<1x512xi1> to vector<1x512xi1>
    %84 = vector.broadcast %83 : vector<1x512xi1> to vector<16x512xi1>
    %85 = vector.broadcast %cst_30 : f32 to vector<16x512xf32>
    %86 = arith.select %84, %82, %85 : vector<16x512xi1>, vector<16x512xf32>
    %87 = arith.truncf %86 : vector<16x512xf32> to vector<16x512xbf16>
    %c96 = arith.constant 96 : index
    %c0_31 = arith.constant 0 : index
    %88 = vector.load %arg9[%c96, %c0_31] : memref<144x512xbf16, #tpu.memory_space<vmem>>, vector<16x512xbf16>
    tpu.vector_store %arg9[%c96, %c0_31], %87 {strides = array<i32>} : memref<144x512xbf16, #tpu.memory_space<vmem>>, vector<16x512xbf16>,
    %c496_i32 = arith.constant 496 : i32
    %89 = tpu.dynamic_rotate %44 by %c496_i32 dim 1 : vector<16x512xf32>, i32 -> vector<16x512xf32>
    %cst_32 = arith.constant 0.000000e+00 : f32
    %90 = vector.shape_cast %27 : vector<1x512xi1> to vector<1x512xi1>
    %91 = vector.broadcast %90 : vector<1x512xi1> to vector<16x512xi1>
    %92 = vector.broadcast %cst_32 : f32 to vector<16x512xf32>
    %93 = arith.select %91, %89, %92 : vector<16x512xi1>, vector<16x512xf32>
    %94 = arith.truncf %93 : vector<16x512xf32> to vector<16x512xbf16>
    %c112 = arith.constant 112 : index
    %c0_33 = arith.constant 0 : index
    %95 = vector.load %arg9[%c112, %c0_33] : memref<144x512xbf16, #tpu.memory_space<vmem>>, vector<16x512xbf16>
    tpu.vector_store %arg9[%c112, %c0_33], %94 {strides = array<i32>} : memref<144x512xbf16, #tpu.memory_space<vmem>>, vector<16x512xbf16>,
    %c495_i32 = arith.constant 495 : i32
    %96 = tpu.dynamic_rotate %44 by %c495_i32 dim 1 : vector<16x512xf32>, i32 -> vector<16x512xf32>
    %cst_34 = arith.constant 0.000000e+00 : f32
    %97 = vector.shape_cast %32 : vector<1x512xi1> to vector<1x512xi1>
    %98 = vector.broadcast %97 : vector<1x512xi1> to vector<16x512xi1>
    %99 = vector.broadcast %cst_34 : f32 to vector<16x512xf32>
    %100 = arith.select %98, %96, %99 : vector<16x512xi1>, vector<16x512xf32>
    %101 = arith.truncf %100 : vector<16x512xf32> to vector<16x512xbf16>
    %c128 = arith.constant 128 : index
    %c0_35 = arith.constant 0 : index
    %102 = vector.load %arg9[%c128, %c0_35] : memref<144x512xbf16, #tpu.memory_space<vmem>>, vector<16x512xbf16>
    tpu.vector_store %arg9[%c128, %c0_35], %101 {strides = array<i32>} : memref<144x512xbf16, #tpu.memory_space<vmem>>, vector<16x512xbf16>,
    %c0_36 = arith.constant 0 : index
    %c0_37 = arith.constant 0 : index
    %103 = vector.load %arg2[%c0_36, %c0_37] : memref<4x144xbf16, #tpu.memory_space<vmem>>, vector<4x144xbf16>
    %c0_38 = arith.constant 0 : index
    %c0_39 = arith.constant 0 : index
    %104 = vector.load %arg9[%c0_38, %c0_39] : memref<144x512xbf16, #tpu.memory_space<vmem>>, vector<144x512xbf16>
    %cst_40 = arith.constant dense<0.000000e+00> : vector<4x512xf32>
    %105 = tpu.matmul %103, %104, %cst_40 {dimension_numbers = #tpu.dot_dimension_numbers<[1], [0], [0], [1], [0, 0, 1, 1], [], []>} : vector<4x144xbf16>, vector<144x512xbf16>, vector<4x512xf32> -> vector<4x512xf32>
    %106 = vector.broadcast %40 : vector<4x1xf32> to vector<4x512xf32>
    %107 = arith.mulf %105, %106 : vector<4x512xf32>
    %108 = vector.broadcast %41 : vector<4x1xf32> to vector<4x512xf32>
    %109 = arith.addf %107, %108 : vector<4x512xf32>
    %cst_41 = arith.constant 0.000000e+00 : f32
    %110 = vector.broadcast %cst_41 : f32 to vector<4x512xf32>
    %111 = arith.maximumf %109, %110 : vector<4x512xf32>
    %112 = tpu.concatenate %111, %33 in 0 : vector<4x512xf32>, vector<12x512xf32> -> vector<16x512xf32>
    %c17_i32_42 = arith.constant 17 : i32
    %113 = tpu.dynamic_rotate %112 by %c17_i32_42 dim 1 : vector<16x512xf32>, i32 -> vector<16x512xf32>
    %cst_43 = arith.constant 0.000000e+00 : f32
    %114 = vector.shape_cast %9 : vector<1x512xi1> to vector<1x512xi1>
    %115 = vector.broadcast %114 : vector<1x512xi1> to vector<16x512xi1>
    %116 = vector.broadcast %cst_43 : f32 to vector<16x512xf32>
    %117 = arith.select %115, %113, %116 : vector<16x512xi1>, vector<16x512xf32>
    %118 = arith.truncf %117 : vector<16x512xf32> to vector<16x512xbf16>
    %c0_44 = arith.constant 0 : index
    %c0_45 = arith.constant 0 : index
    %119 = vector.load %arg9[%c0_44, %c0_45] : memref<144x512xbf16, #tpu.memory_space<vmem>>, vector<16x512xbf16>
    tpu.vector_store %arg9[%c0_44, %c0_45], %118 {strides = array<i32>} : memref<144x512xbf16, #tpu.memory_space<vmem>>, vector<16x512xbf16>,
    %c16_i32_46 = arith.constant 16 : i32
    %120 = tpu.dynamic_rotate %112 by %c16_i32_46 dim 1 : vector<16x512xf32>, i32 -> vector<16x512xf32>
    %cst_47 = arith.constant 0.000000e+00 : f32
    %121 = vector.shape_cast %11 : vector<1x512xi1> to vector<1x512xi1>
    %122 = vector.broadcast %121 : vector<1x512xi1> to vector<16x512xi1>
    %123 = vector.broadcast %cst_47 : f32 to vector<16x512xf32>
    %124 = arith.select %122, %120, %123 : vector<16x512xi1>, vector<16x512xf32>
    %125 = arith.truncf %124 : vector<16x512xf32> to vector<16x512xbf16>
    %c16_48 = arith.constant 16 : index
    %c0_49 = arith.constant 0 : index
    %126 = vector.load %arg9[%c16_48, %c0_49] : memref<144x512xbf16, #tpu.memory_space<vmem>>, vector<16x512xbf16>
    tpu.vector_store %arg9[%c16_48, %c0_49], %125 {strides = array<i32>} : memref<144x512xbf16, #tpu.memory_space<vmem>>, vector<16x512xbf16>,
    %c15_i32_50 = arith.constant 15 : i32
    %127 = tpu.dynamic_rotate %112 by %c15_i32_50 dim 1 : vector<16x512xf32>, i32 -> vector<16x512xf32>
    %cst_51 = arith.constant 0.000000e+00 : f32
    %128 = vector.shape_cast %16 : vector<1x512xi1> to vector<1x512xi1>
    %129 = vector.broadcast %128 : vector<1x512xi1> to vector<16x512xi1>
    %130 = vector.broadcast %cst_51 : f32 to vector<16x512xf32>
    %131 = arith.select %129, %127, %130 : vector<16x512xi1>, vector<16x512xf32>
    %132 = arith.truncf %131 : vector<16x512xf32> to vector<16x512xbf16>
    %c32_52 = arith.constant 32 : index
    %c0_53 = arith.constant 0 : index
    %133 = vector.load %arg9[%c32_52, %c0_53] : memref<144x512xbf16, #tpu.memory_space<vmem>>, vector<16x512xbf16>
    tpu.vector_store %arg9[%c32_52, %c0_53], %132 {strides = array<i32>} : memref<144x512xbf16, #tpu.memory_space<vmem>>, vector<16x512xbf16>,
    %c1_i32_54 = arith.constant 1 : i32
    %134 = tpu.dynamic_rotate %112 by %c1_i32_54 dim 1 : vector<16x512xf32>, i32 -> vector<16x512xf32>
    %cst_55 = arith.constant 0.000000e+00 : f32
    %135 = vector.shape_cast %18 : vector<1x512xi1> to vector<1x512xi1>
    %136 = vector.broadcast %135 : vector<1x512xi1> to vector<16x512xi1>
    %137 = vector.broadcast %cst_55 : f32 to vector<16x512xf32>
    %138 = arith.select %136, %134, %137 : vector<16x512xi1>, vector<16x512xf32>
    %139 = arith.truncf %138 : vector<16x512xf32> to vector<16x512xbf16>
    %c48_56 = arith.constant 48 : index
    %c0_57 = arith.constant 0 : index
    %140 = vector.load %arg9[%c48_56, %c0_57] : memref<144x512xbf16, #tpu.memory_space<vmem>>, vector<16x512xbf16>
    tpu.vector_store %arg9[%c48_56, %c0_57], %139 {strides = array<i32>} : memref<144x512xbf16, #tpu.memory_space<vmem>>, vector<16x512xbf16>,
    %141 = arith.truncf %112 : vector<16x512xf32> to vector<16x512xbf16>
    %c64_58 = arith.constant 64 : index
    %c0_59 = arith.constant 0 : index
    %142 = vector.load %arg9[%c64_58, %c0_59] : memref<144x512xbf16, #tpu.memory_space<vmem>>, vector<16x512xbf16>
    tpu.vector_store %arg9[%c64_58, %c0_59], %141 {strides = array<i32>} : memref<144x512xbf16, #tpu.memory_space<vmem>>, vector<16x512xbf16>,
    %c511_i32_60 = arith.constant 511 : i32
    %143 = tpu.dynamic_rotate %112 by %c511_i32_60 dim 1 : vector<16x512xf32>, i32 -> vector<16x512xf32>
    %cst_61 = arith.constant 0.000000e+00 : f32
    %144 = vector.shape_cast %20 : vector<1x512xi1> to vector<1x512xi1>
    %145 = vector.broadcast %144 : vector<1x512xi1> to vector<16x512xi1>
    %146 = vector.broadcast %cst_61 : f32 to vector<16x512xf32>
    %147 = arith.select %145, %143, %146 : vector<16x512xi1>, vector<16x512xf32>
    %148 = arith.truncf %147 : vector<16x512xf32> to vector<16x512xbf16>
    %c80_62 = arith.constant 80 : index
    %c0_63 = arith.constant 0 : index
    %149 = vector.load %arg9[%c80_62, %c0_63] : memref<144x512xbf16, #tpu.memory_space<vmem>>, vector<16x512xbf16>
    tpu.vector_store %arg9[%c80_62, %c0_63], %148 {strides = array<i32>} : memref<144x512xbf16, #tpu.memory_space<vmem>>, vector<16x512xbf16>,
    %c497_i32_64 = arith.constant 497 : i32
    %150 = tpu.dynamic_rotate %112 by %c497_i32_64 dim 1 : vector<16x512xf32>, i32 -> vector<16x512xf32>
    %cst_65 = arith.constant 0.000000e+00 : f32
    %151 = vector.shape_cast %25 : vector<1x512xi1> to vector<1x512xi1>
    %152 = vector.broadcast %151 : vector<1x512xi1> to vector<16x512xi1>
    %153 = vector.broadcast %cst_65 : f32 to vector<16x512xf32>
    %154 = arith.select %152, %150, %153 : vector<16x512xi1>, vector<16x512xf32>
    %155 = arith.truncf %154 : vector<16x512xf32> to vector<16x512xbf16>
    %c96_66 = arith.constant 96 : index
    %c0_67 = arith.constant 0 : index
    %156 = vector.load %arg9[%c96_66, %c0_67] : memref<144x512xbf16, #tpu.memory_space<vmem>>, vector<16x512xbf16>
    tpu.vector_store %arg9[%c96_66, %c0_67], %155 {strides = array<i32>} : memref<144x512xbf16, #tpu.memory_space<vmem>>, vector<16x512xbf16>,
    %c496_i32_68 = arith.constant 496 : i32
    %157 = tpu.dynamic_rotate %112 by %c496_i32_68 dim 1 : vector<16x512xf32>, i32 -> vector<16x512xf32>
    %cst_69 = arith.constant 0.000000e+00 : f32
    %158 = vector.shape_cast %27 : vector<1x512xi1> to vector<1x512xi1>
    %159 = vector.broadcast %158 : vector<1x512xi1> to vector<16x512xi1>
    %160 = vector.broadcast %cst_69 : f32 to vector<16x512xf32>
    %161 = arith.select %159, %157, %160 : vector<16x512xi1>, vector<16x512xf32>
    %162 = arith.truncf %161 : vector<16x512xf32> to vector<16x512xbf16>
    %c112_70 = arith.constant 112 : index
    %c0_71 = arith.constant 0 : index
    %163 = vector.load %arg9[%c112_70, %c0_71] : memref<144x512xbf16, #tpu.memory_space<vmem>>, vector<16x512xbf16>
    tpu.vector_store %arg9[%c112_70, %c0_71], %162 {strides = array<i32>} : memref<144x512xbf16, #tpu.memory_space<vmem>>, vector<16x512xbf16>,
    %c495_i32_72 = arith.constant 495 : i32
    %164 = tpu.dynamic_rotate %112 by %c495_i32_72 dim 1 : vector<16x512xf32>, i32 -> vector<16x512xf32>
    %cst_73 = arith.constant 0.000000e+00 : f32
    %165 = vector.shape_cast %32 : vector<1x512xi1> to vector<1x512xi1>
    %166 = vector.broadcast %165 : vector<1x512xi1> to vector<16x512xi1>
    %167 = vector.broadcast %cst_73 : f32 to vector<16x512xf32>
    %168 = arith.select %166, %164, %167 : vector<16x512xi1>, vector<16x512xf32>
    %169 = arith.truncf %168 : vector<16x512xf32> to vector<16x512xbf16>
    %c128_74 = arith.constant 128 : index
    %c0_75 = arith.constant 0 : index
    %170 = vector.load %arg9[%c128_74, %c0_75] : memref<144x512xbf16, #tpu.memory_space<vmem>>, vector<16x512xbf16>
    tpu.vector_store %arg9[%c128_74, %c0_75], %169 {strides = array<i32>} : memref<144x512xbf16, #tpu.memory_space<vmem>>, vector<16x512xbf16>,
    %c0_76 = arith.constant 0 : index
    %c0_77 = arith.constant 0 : index
    %171 = vector.load %arg3[%c0_76, %c0_77] : memref<4x144xbf16, #tpu.memory_space<vmem>>, vector<4x144xbf16>
    %c0_78 = arith.constant 0 : index
    %c0_79 = arith.constant 0 : index
    %172 = vector.load %arg9[%c0_78, %c0_79] : memref<144x512xbf16, #tpu.memory_space<vmem>>, vector<144x512xbf16>
    %cst_80 = arith.constant dense<0.000000e+00> : vector<4x512xf32>
    %173 = tpu.matmul %171, %172, %cst_80 {dimension_numbers = #tpu.dot_dimension_numbers<[1], [0], [0], [1], [0, 0, 1, 1], [], []>} : vector<4x144xbf16>, vector<144x512xbf16>, vector<4x512xf32> -> vector<4x512xf32>
    %174 = vector.broadcast %42 : vector<4x1xf32> to vector<4x512xf32>
    %175 = arith.mulf %173, %174 : vector<4x512xf32>
    %176 = vector.broadcast %43 : vector<4x1xf32> to vector<4x512xf32>
    %177 = arith.addf %175, %176 : vector<4x512xf32>
    %c0_81 = arith.constant 0 : index
    %c0_82 = arith.constant 0 : index
    %c0_83 = arith.constant 0 : index
    %178 = vector.load %arg1[%c0_81, %c0_82, %c0_83] : memref<2x4x256xf32, #tpu.memory_space<vmem>>, vector<1x4x256xf32>
    %179 = vector.shape_cast %178 : vector<1x4x256xf32> to vector<4x256xf32>
    %180 = vector.extract_strided_slice %177 {offsets = [0, 0], sizes = [4, 256], strides = [1, 1]} : vector<4x512xf32> to vector<4x256xf32>
    %cst_84 = arith.constant dense<0.000000e+00> : vector<4xf32>
    %181 = vector.multi_reduction <add>, %179, %cst_84 [1] : vector<4x256xf32> to vector<4xf32>
    %182 = vector.shape_cast %181 : vector<4xf32> to vector<4x1xf32>
    %cst_85 = arith.constant 2.560000e+02 : f32
    %183 = vector.broadcast %cst_85 : f32 to vector<4x1xf32>
    %184 = arith.divf %182, %183 : vector<4x1xf32>
    %cst_86 = arith.constant dense<0.000000e+00> : vector<4xf32>
    %185 = vector.multi_reduction <add>, %180, %cst_86 [1] : vector<4x256xf32> to vector<4xf32>
    %186 = vector.shape_cast %185 : vector<4xf32> to vector<4x1xf32>
    %cst_87 = arith.constant 2.560000e+02 : f32
    %187 = vector.broadcast %cst_87 : f32 to vector<4x1xf32>
    %188 = arith.divf %186, %187 : vector<4x1xf32>
    %189 = arith.addf %184, %188 : vector<4x1xf32>
    %cst_88 = arith.constant 0.000000e+00 : f32
    %190 = vector.broadcast %cst_88 : f32 to vector<4x1xf32>
    %191 = arith.maximumf %189, %190 : vector<4x1xf32>
    %c0_89 = arith.constant 0 : index
    %c0_90 = arith.constant 0 : index
    %192 = vector.load %arg5[%c0_89, %c0_90] : memref<4x4xf32, #tpu.memory_space<vmem>>, vector<4x4xf32>
    %cst_91 = arith.constant dense<0.000000e+00> : vector<4x1xf32>
    %193 = tpu.matmul %192, %191, %cst_91 {dimension_numbers = #tpu.dot_dimension_numbers<[1], [0], [0], [1], [0, 0, 1, 1], [], []>} : vector<4x4xf32>, vector<4x1xf32>, vector<4x1xf32> -> vector<4x1xf32>
    %194 = arith.negf %193 : vector<4x1xf32>
    %195 = math.exp %194 : vector<4x1xf32>
    %cst_92 = arith.constant 1.000000e+00 : f32
    %196 = vector.broadcast %cst_92 : f32 to vector<4x1xf32>
    %197 = arith.addf %196, %195 : vector<4x1xf32>
    %198 = arith.divf %196, %197 : vector<4x1xf32>
    %c0_93 = arith.constant 0 : index
    %c0_94 = arith.constant 0 : index
    %199 = vector.load %arg6[%c0_93, %c0_94] : memref<4x128xf32, #tpu.memory_space<vmem>>, vector<4x128xf32>
    %200 = vector.broadcast %193 : vector<4x1xf32> to vector<4x128xf32>
    %201 = arith.mulf %200, %199 : vector<4x128xf32>
    %cst_95 = arith.constant dense<0.000000e+00> : vector<128xf32>
    %202 = vector.multi_reduction <add>, %201, %cst_95 [0] : vector<4x128xf32> to vector<128xf32>
    %203 = vector.shape_cast %202 : vector<128xf32> to vector<1x128xf32>
    %204 = vector.broadcast %198 : vector<4x1xf32> to vector<4x256xf32>
    %205 = arith.mulf %179, %204 : vector<4x256xf32>
    %206 = arith.addf %180, %205 : vector<4x256xf32>
    %cst_96 = arith.constant 0.000000e+00 : f32
    %207 = vector.broadcast %cst_96 : f32 to vector<4x256xf32>
    %208 = arith.maximumf %206, %207 : vector<4x256xf32>
    %c0_97 = arith.constant 0 : index
    %c0_98 = arith.constant 0 : index
    %c0_99 = arith.constant 0 : index
    %209 = vector.load %arg7[%c0_97, %c0_98, %c0_99] : memref<2x4x256xf32, #tpu.memory_space<vmem>>, vector<1x4x256xf32>
    %210 = vector.shape_cast %209 : vector<1x4x256xf32> to vector<4x256xf32>
    %211 = vector.shape_cast %208 : vector<4x256xf32> to vector<1x4x256xf32>
    tpu.vector_store %arg7[%c0_97, %c0_98, %c0_99], %211 {strides = array<i32>} : memref<2x4x256xf32, #tpu.memory_space<vmem>>, vector<1x4x256xf32>,
    %c0_100 = arith.constant 0 : index
    %c0_101 = arith.constant 0 : index
    %c0_102 = arith.constant 0 : index
    %212 = vector.load %arg8[%c0_100, %c0_101, %c0_102] : memref<2x1x128xf32, #tpu.memory_space<vmem>>, vector<1x1x128xf32>
    %213 = vector.shape_cast %212 : vector<1x1x128xf32> to vector<1x128xf32>
    %214 = vector.shape_cast %203 : vector<1x128xf32> to vector<1x1x128xf32>
    tpu.vector_store %arg8[%c0_100, %c0_101, %c0_102], %214 {strides = array<i32>} : memref<2x1x128xf32, #tpu.memory_space<vmem>>, vector<1x1x128xf32>,
    %c1_103 = arith.constant 1 : index
    %c0_104 = arith.constant 0 : index
    %c0_105 = arith.constant 0 : index
    %215 = vector.load %arg1[%c1_103, %c0_104, %c0_105] : memref<2x4x256xf32, #tpu.memory_space<vmem>>, vector<1x4x256xf32>
    %216 = vector.shape_cast %215 : vector<1x4x256xf32> to vector<4x256xf32>
    %217 = vector.extract_strided_slice %177 {offsets = [0, 256], sizes = [4, 256], strides = [1, 1]} : vector<4x512xf32> to vector<4x256xf32>
    %cst_106 = arith.constant dense<0.000000e+00> : vector<4xf32>
    %218 = vector.multi_reduction <add>, %216, %cst_106 [1] : vector<4x256xf32> to vector<4xf32>
    %219 = vector.shape_cast %218 : vector<4xf32> to vector<4x1xf32>
    %cst_107 = arith.constant 2.560000e+02 : f32
    %220 = vector.broadcast %cst_107 : f32 to vector<4x1xf32>
    %221 = arith.divf %219, %220 : vector<4x1xf32>
    %cst_108 = arith.constant dense<0.000000e+00> : vector<4xf32>
    %222 = vector.multi_reduction <add>, %217, %cst_108 [1] : vector<4x256xf32> to vector<4xf32>
    %223 = vector.shape_cast %222 : vector<4xf32> to vector<4x1xf32>
    %cst_109 = arith.constant 2.560000e+02 : f32
    %224 = vector.broadcast %cst_109 : f32 to vector<4x1xf32>
    %225 = arith.divf %223, %224 : vector<4x1xf32>
    %226 = arith.addf %221, %225 : vector<4x1xf32>
    %cst_110 = arith.constant 0.000000e+00 : f32
    %227 = vector.broadcast %cst_110 : f32 to vector<4x1xf32>
    %228 = arith.maximumf %226, %227 : vector<4x1xf32>
    %c0_111 = arith.constant 0 : index
    %c0_112 = arith.constant 0 : index
    %229 = vector.load %arg5[%c0_111, %c0_112] : memref<4x4xf32, #tpu.memory_space<vmem>>, vector<4x4xf32>
    %cst_113 = arith.constant dense<0.000000e+00> : vector<4x1xf32>
    %230 = tpu.matmul %229, %228, %cst_113 {dimension_numbers = #tpu.dot_dimension_numbers<[1], [0], [0], [1], [0, 0, 1, 1], [], []>} : vector<4x4xf32>, vector<4x1xf32>, vector<4x1xf32> -> vector<4x1xf32>
    %231 = arith.negf %230 : vector<4x1xf32>
    %232 = math.exp %231 : vector<4x1xf32>
    %cst_114 = arith.constant 1.000000e+00 : f32
    %233 = vector.broadcast %cst_114 : f32 to vector<4x1xf32>
    %234 = arith.addf %233, %232 : vector<4x1xf32>
    %235 = arith.divf %233, %234 : vector<4x1xf32>
    %c0_115 = arith.constant 0 : index
    %c0_116 = arith.constant 0 : index
    %236 = vector.load %arg6[%c0_115, %c0_116] : memref<4x128xf32, #tpu.memory_space<vmem>>, vector<4x128xf32>
    %237 = vector.broadcast %230 : vector<4x1xf32> to vector<4x128xf32>
    %238 = arith.mulf %237, %236 : vector<4x128xf32>
    %cst_117 = arith.constant dense<0.000000e+00> : vector<128xf32>
    %239 = vector.multi_reduction <add>, %238, %cst_117 [0] : vector<4x128xf32> to vector<128xf32>
    %240 = vector.shape_cast %239 : vector<128xf32> to vector<1x128xf32>
    %241 = vector.broadcast %235 : vector<4x1xf32> to vector<4x256xf32>
    %242 = arith.mulf %216, %241 : vector<4x256xf32>
    %243 = arith.addf %217, %242 : vector<4x256xf32>
    %cst_118 = arith.constant 0.000000e+00 : f32
    %244 = vector.broadcast %cst_118 : f32 to vector<4x256xf32>
    %245 = arith.maximumf %243, %244 : vector<4x256xf32>
    %c1_119 = arith.constant 1 : index
    %c0_120 = arith.constant 0 : index
    %c0_121 = arith.constant 0 : index
    %246 = vector.load %arg7[%c1_119, %c0_120, %c0_121] : memref<2x4x256xf32, #tpu.memory_space<vmem>>, vector<1x4x256xf32>
    %247 = vector.shape_cast %246 : vector<1x4x256xf32> to vector<4x256xf32>
    %248 = vector.shape_cast %245 : vector<4x256xf32> to vector<1x4x256xf32>
    tpu.vector_store %arg7[%c1_119, %c0_120, %c0_121], %248 {strides = array<i32>} : memref<2x4x256xf32, #tpu.memory_space<vmem>>, vector<1x4x256xf32>,
    %c1_122 = arith.constant 1 : index
    %c0_123 = arith.constant 0 : index
    %c0_124 = arith.constant 0 : index
    %249 = vector.load %arg8[%c1_122, %c0_123, %c0_124] : memref<2x1x128xf32, #tpu.memory_space<vmem>>, vector<1x1x128xf32>
    %250 = vector.shape_cast %249 : vector<1x1x128xf32> to vector<1x128xf32>
    %251 = vector.shape_cast %240 : vector<1x128xf32> to vector<1x1x128xf32>
    tpu.vector_store %arg8[%c1_122, %c0_123, %c0_124], %251 {strides = array<i32>} : memref<2x1x128xf32, #tpu.memory_space<vmem>>, vector<1x1x128xf32>,
    return
  }
  func.func @transform_0(%arg0: i32) -> (i32, i32, i32) {
    %c0_i32 = arith.constant 0 : i32
    %c0_i32_0 = arith.constant 0 : i32
    %c0_i32_1 = arith.constant 0 : i32
    return %arg0, %c0_i32, %c0_i32_0 : i32, i32, i32
  }
  func.func @transform_1(%arg0: i32) -> (i32, i32) {
    %c0_i32 = arith.constant 0 : i32
    %c0_i32_0 = arith.constant 0 : i32
    %c0_i32_1 = arith.constant 0 : i32
    return %c0_i32, %c0_i32_0 : i32, i32
  }
  func.func @transform_2(%arg0: i32) -> (i32, i32) {
    %c0_i32 = arith.constant 0 : i32
    %c0_i32_0 = arith.constant 0 : i32
    %c0_i32_1 = arith.constant 0 : i32
    return %c0_i32, %c0_i32_0 : i32, i32
  }
  func.func @transform_3(%arg0: i32) -> (i32, i32) {
    %c0_i32 = arith.constant 0 : i32
    %c0_i32_0 = arith.constant 0 : i32
    %c0_i32_1 = arith.constant 0 : i32
    return %c0_i32, %c0_i32_0 : i32, i32
  }
  func.func @transform_4(%arg0: i32) -> (i32, i32) {
    %c0_i32 = arith.constant 0 : i32
    %c0_i32_0 = arith.constant 0 : i32
    %c0_i32_1 = arith.constant 0 : i32
    return %c0_i32, %c0_i32_0 : i32, i32
  }
  func.func @transform_5(%arg0: i32) -> (i32, i32) {
    %c0_i32 = arith.constant 0 : i32
    %c0_i32_0 = arith.constant 0 : i32
    %c0_i32_1 = arith.constant 0 : i32
    return %c0_i32, %c0_i32_0 : i32, i32
  }
  func.func @transform_6(%arg0: i32) -> (i32, i32, i32) {
    %c0_i32 = arith.constant 0 : i32
    %c0_i32_0 = arith.constant 0 : i32
    %c0_i32_1 = arith.constant 0 : i32
    return %arg0, %c0_i32, %c0_i32_0 : i32, i32, i32
  }
  func.func @transform_7(%arg0: i32) -> (i32, i32, i32) {
    %c0_i32 = arith.constant 0 : i32
    %c0_i32_0 = arith.constant 0 : i32
    %c0_i32_1 = arith.constant 0 : i32
    return %arg0, %c0_i32, %c0_i32_0 : i32, i32, i32
  }
}

</mosaic_0001>

<llo_original>
// kernel: tpu_custom_call.1
$region0: #{tpu_custom_call.1}
  #allocation0 [shape = 'u32[]', space=smem, size = 0x4, offset = 0x4, fixed_abs, tag = 'smem constant byte address 0x4 - core index']
  #allocation1 [shape = 'u32[144,128]{1,0:T(1,128)}', space=vmem, size = 0x12000, scoped, tag = 'internal scratch']
  #allocation2 [shape = 'bf16[144,512]{1,0:T(16,128)(2,1)}', space=vmem, size = 0x24000, scoped, tag = 'scratch operand']
  %s0 = inlined_call_operand.hbm [shape: f32[2,4,256], index: 0, kind: input, shape index: {}]
  %s1 = inlined_call_operand.hbm [shape: bf16[4,144], index: 1, kind: input, shape index: {}]
  %s2 = inlined_call_operand.vmem [shape: bf16[4,144], index: 2, kind: input, shape index: {}]
  %s3 = inlined_call_operand.vmem [shape: f32[4,4], index: 3, kind: input, shape index: {}]
  %s4 = inlined_call_operand.vmem [shape: f32[4,4], index: 4, kind: input, shape index: {}]
  %s5 = inlined_call_operand.vmem [shape: f32[4,128], index: 5, kind: input, shape index: {}]
  %s6 = inlined_call_operand.hbm [shape: f32[2,4,256], index: 6, kind: output, shape index: {0}]
  %s7 = inlined_call_operand.hbm [shape: f32[2,1,128], index: 7, kind: output, shape index: {1}]
  %8 = xla_tuple %s6, %s7
  %s9 = sld [smem:[#allocation0]]
  $region50: #{tpu_custom_call.1} parent=0
    _
  %s11 = ssub.s32 1, %s9
  %s12 = scalar_select 0, %s11, %s9
  $region1: #{tpu_custom_call.1} parent=0
    #allocation3 [shape = 'u8[8192]{0}', space=vmem, size = 0x2000, scoped, tag = 'input window, operand 0, single buffered']
    #allocation4 [shape = 's32[1]{0}', space=sflag, size = 0x4, scoped, tag = 'scoped memory for tpu_custom_call.1']
    #allocation5 [shape = 's32[1]{0}', space=sflag, size = 0x4, scoped, tag = 'scoped memory for tpu_custom_call.1']
    #allocation6 [shape = 'u8[2048]{0}', space=vmem, size = 0x800, scoped, tag = 'input window, operand 1, single buffered']
    #allocation7 [shape = 's32[1]{0}', space=sflag, size = 0x4, scoped, tag = 'scoped memory for tpu_custom_call.1']
    #allocation8 [shape = 'u8[8192]{0}', space=vmem, size = 0x2000, scoped, tag = 'output window, operand 0, single buffered']
    #allocation9 [shape = 'u8[1024]{0}', space=vmem, size = 0x400, scoped, tag = 'output window, operand 1, single buffered']
    #allocation10 [shape = 's32[1]{0}', space=sflag, size = 0x4, scoped, tag = 'scoped memory for tpu_custom_call.1']
    %13 = vsyncpa [#allocation4], 0
    %14 = vsyncpa [#allocation7], 0
    %15 = vsyncpa [#allocation5], 0
    %16 = vsyncpa [#allocation10], 0
    // Predicated region
    $region2: #{tpu_custom_call.1} parent=1 // pred_check
      _
    $region3: #{tpu_custom_call.1} parent=1 // pred_check_branch
      %18 = sbr.rel (0) target = $region5
    $region4: #{tpu_custom_call.1} parent=1 // pred_region
      %s20 = ssub.s32 256, 256
      %21 = vsyncadd [#allocation4], %s20
      %s22 = sshll.u32 [#allocation3], 4
      %s23 = int_to_ptr.vmem [resolvable:$true] %s22
      %28 = dma.hbm_to_vmem [thread:$0]  %s0, 256, %s23, [#allocation4], 128, 128, 8
    $region5: #{tpu_custom_call.1} parent=1 // pred_fallthru
      _
    // Predicated region
    $region6: #{tpu_custom_call.1} parent=1 // pred_check
      _
    $region7: #{tpu_custom_call.1} parent=1 // pred_check_branch
      %30 = sbr.rel (0) target = $region9
    $region8: #{tpu_custom_call.1} parent=1 // pred_region
      %s32 = ssub.s32 64, 64
      %33 = vsyncadd [#allocation7], %s32
      %s35 = sshll.u32 [#allocation6], 4
      %s36 = int_to_ptr.vmem [resolvable:$true] %s35
      %38 = dma.hbm_to_vmem [thread:$0]  %s1, 64, %s36, [#allocation7]
    $region9: #{tpu_custom_call.1} parent=1 // pred_fallthru
      _
    // Predicated region
    $region10: #{tpu_custom_call.1} parent=1 // pred_check
      _
    $region11: #{tpu_custom_call.1} parent=1 // pred_check_branch
      %40 = sbr.rel (0) target = $region13
    $region12: #{tpu_custom_call.1} parent=1 // pred_region
      _
    $region13: #{tpu_custom_call.1} parent=1 // pred_fallthru
      _
    // Predicated region
    $region14: #{tpu_custom_call.1} parent=1 // pred_check
      _
    $region15: #{tpu_custom_call.1} parent=1 // pred_check_branch
      %42 = sbr.rel (0) target = $region17
    $region16: #{tpu_custom_call.1} parent=1 // pred_region
      _
    $region17: #{tpu_custom_call.1} parent=1 // pred_fallthru
      _
    // Predicated region
    $region18: #{tpu_custom_call.1} parent=1 // pred_check
      _
    $region19: #{tpu_custom_call.1} parent=1 // pred_check_branch
      %44 = sbr.rel (0) target = $region21
    $region20: #{tpu_custom_call.1} parent=1 // pred_region
      _
    $region21: #{tpu_custom_call.1} parent=1 // pred_fallthru
      _
    // Predicated region
    $region22: #{tpu_custom_call.1} parent=1 // pred_check
      _
    $region23: #{tpu_custom_call.1} parent=1 // pred_check_branch
      %46 = sbr.rel (0) target = $region25
    $region24: #{tpu_custom_call.1} parent=1 // pred_region
      _
    $region25: #{tpu_custom_call.1} parent=1 // pred_fallthru
      _
    // Predicated region
    $region26: #{tpu_custom_call.1} parent=1 // pred_check
      _
    $region27: #{tpu_custom_call.1} parent=1 // pred_check_branch
      %48 = sbr.rel (0) target = $region29
    $region28: #{tpu_custom_call.1} parent=1 // pred_region
      %49 = dma.done [#allocation4], 256
    $region29: #{tpu_custom_call.1} parent=1 // pred_fallthru
      _
    // Predicated region
    $region30: #{tpu_custom_call.1} parent=1 // pred_check
      _
    $region31: #{tpu_custom_call.1} parent=1 // pred_check_branch
      %51 = sbr.rel (0) target = $region33
    $region32: #{tpu_custom_call.1} parent=1 // pred_region
      %52 = dma.done [#allocation7], 64
    $region33: #{tpu_custom_call.1} parent=1 // pred_fallthru
      _
    %v54 = vlaneseq
    %v55 = vand.u32 %v54, 127
    %v56 = vadd.s32 %v55, 128
    %v57 = vadd.s32 %v55, 256
    %v58 = vadd.s32 %v55, 384
    %v59 = vand.u32 %v55, 255
    %v60 = vand.u32 %v56, 255
    %v61 = vand.u32 %v57, 255
    %v62 = vand.u32 %v58, 255
    %v63 = vand.u32 %v59, 15
    %v64 = vand.u32 %v60, 15
    %v65 = vand.u32 %v61, 15
    %v66 = vand.u32 %v62, 15
    %vm67 = vcmp.ge.s32.totalorder %v59, 16
    %vm68 = vcmp.ge.s32.totalorder %v60, 16
    %vm69 = vcmp.ge.s32.totalorder %v61, 16
    %vm70 = vcmp.ge.s32.totalorder %v62, 16
    %vm71 = vcmp.ge.s32.totalorder %v63, 1
    %vm72 = vcmp.ge.s32.totalorder %v64, 1
    %vm73 = vcmp.ge.s32.totalorder %v65, 1
    %vm74 = vcmp.ge.s32.totalorder %v66, 1
    %vm75 = vmand %vm67, %vm71
    %vm76 = vmand %vm68, %vm72
    %vm77 = vmand %vm69, %vm73
    %vm78 = vmand %vm70, %vm74
    %vm79 = vcmp.lt.s32.totalorder %v63, 15
    %vm80 = vcmp.lt.s32.totalorder %v64, 15
    %vm81 = vcmp.lt.s32.totalorder %v65, 15
    %vm82 = vcmp.lt.s32.totalorder %v66, 15
    %vm83 = vmand %vm67, %vm79
    %vm84 = vmand %vm68, %vm80
    %vm85 = vmand %vm69, %vm81
    %vm86 = vmand %vm70, %vm82
    %vm87 = vcmp.lt.s32.totalorder %v59, 240
    %vm88 = vcmp.lt.s32.totalorder %v60, 240
    %vm89 = vcmp.lt.s32.totalorder %v61, 240
    %vm90 = vcmp.lt.s32.totalorder %v62, 240
    %vm91 = vmand %vm87, %vm71
    %vm92 = vmand %vm88, %vm72
    %vm93 = vmand %vm89, %vm73
    %vm94 = vmand %vm90, %vm74
    %vm95 = vmand %vm87, %vm79
    %vm96 = vmand %vm88, %vm80
    %vm97 = vmand %vm89, %vm81
    %vm98 = vmand %vm90, %vm82
    %v99 = vld [vmem:[#allocation3] sm:$0xff]
    %s100 = scalar_lea.vmem [#allocation3], 8
    %v101 = vld [vmem:[%s100] sm:$0xff]
    %v103 = vcombine.high %v99, %v99
    %v106 = vcombine.high %v101, %v101
    %v108 = vld [vmem:[%s3] sm:$0xf]
    %vm109 = vcmask 1043456
    %v110 = vsel %vm109, %v99, 0.0
    %v111 = vsel %vm109, %v103, 0.0
    %v112 = vsel %vm109, %v101, 0.0
    %v113 = vsel %vm109, %v106, 0.0
    %114 = vrot.lane.b32.xlu0 %v110, 17
    %v115 = vpop.permute.xlu0 %114
    %116 = vrot.lane.b32.xlu0 0.0, 17
    %v117 = vpop.permute.xlu0 %116
    %118 = vrot.lane.b32.xlu0 %v111, 17
    %v119 = vpop.permute.xlu0 %118
    %120 = vrot.lane.b32.xlu0 %v112, 17
    %v121 = vpop.permute.xlu0 %120
    %122 = vrot.lane.b32.xlu0 %v113, 17
    %v123 = vpop.permute.xlu0 %122
    %vm124 = vcmp.lt.s32.totalorder %v55, 17
    %v125 = vsel %vm124, %v121, %v123
    %v126 = vsel %vm124, %v119, %v121
    %v127 = vsel %vm124, %v115, %v119
    %v128 = vsel %vm124, %v123, %v115
    %v129 = vsel %vm75, 1, 0
    %v130 = vsel %vm76, 1, 0
    %v131 = vsel %vm77, 1, 0
    %v132 = vsel %vm78, 1, 0
    %vm133 = vcmp.eq.s32.totalorder %v129, 1
    %vm134 = vcmp.eq.s32.totalorder %v130, 1
    %vm135 = vcmp.eq.s32.totalorder %v131, 1
    %vm136 = vcmp.eq.s32.totalorder %v132, 1
    %v137 = vsel %vm133, %v128, 0.0
    %v138 = vsel %vm134, %v127, 0.0
    %v139 = vsel %vm135, %v126, 0.0
    %v140 = vsel %vm136, %v125, 0.0
    %v141 = vsel %vm133, %v117, 0.0
    %v142 = vsel %vm134, %v117, 0.0
    %v143 = vsel %vm135, %v117, 0.0
    %v144 = vsel %vm136, %v117, 0.0
    %v145 = vpack.c.bf16 %v141, %v137
    %v146 = vpack.c.bf16 %v142, %v138
    %v147 = vpack.c.bf16 %v143, %v139
    %v148 = vpack.c.bf16 %v144, %v140
    %149 = vst [vmem:[#allocation2] sm:$0xff] %v145
    %150 = vst [vmem:[#allocation2 + $0x8] sm:$0xff] %v146
    %151 = vst [vmem:[#allocation2 + $0x10] sm:$0xff] %v147
    %152 = vst [vmem:[#allocation2 + $0x18] sm:$0xff] %v148
    %153 = vrot.lane.b32.xlu0 %v110, 16
    %v154 = vpop.permute.xlu0 %153
    %155 = vrot.lane.b32.xlu0 0.0, 16
    %v156 = vpop.permute.xlu0 %155
    %157 = vrot.lane.b32.xlu0 %v111, 16
    %v158 = vpop.permute.xlu0 %157
    %159 = vrot.lane.b32.xlu0 %v112, 16
    %v160 = vpop.permute.xlu0 %159
    %161 = vrot.lane.b32.xlu0 %v113, 16
    %v162 = vpop.permute.xlu0 %161
    %vm163 = vcmp.lt.s32.totalorder %v55, 16
    %v164 = vsel %vm163, %v160, %v162
    %v165 = vsel %vm163, %v158, %v160
    %v166 = vsel %vm163, %v154, %v158
    %v167 = vsel %vm163, %v162, %v154
    %v168 = vsel %vm67, 1, 0
    %v169 = vsel %vm68, 1, 0
    %v170 = vsel %vm69, 1, 0
    %v171 = vsel %vm70, 1, 0
    %vm172 = vcmp.eq.s32.totalorder %v168, 1
    %vm173 = vcmp.eq.s32.totalorder %v169, 1
    %vm174 = vcmp.eq.s32.totalorder %v170, 1
    %vm175 = vcmp.eq.s32.totalorder %v171, 1
    %v176 = vsel %vm172, %v167, 0.0
    %v177 = vsel %vm173, %v166, 0.0
    %v178 = vsel %vm174, %v165, 0.0
    %v179 = vsel %vm175, %v164, 0.0
    %v180 = vsel %vm172, %v156, 0.0
    %v181 = vsel %vm173, %v156, 0.0
    %v182 = vsel %vm174, %v156, 0.0
    %v183 = vsel %vm175, %v156, 0.0
    %v184 = vpack.c.bf16 %v180, %v176
    %v185 = vpack.c.bf16 %v181, %v177
    %v186 = vpack.c.bf16 %v182, %v178
    %v187 = vpack.c.bf16 %v183, %v179
    %188 = vst [vmem:[#allocation2 + $0x20] sm:$0xff] %v184
    %189 = vst [vmem:[#allocation2 + $0x28] sm:$0xff] %v185
    %190 = vst [vmem:[#allocation2 + $0x30] sm:$0xff] %v186
    %191 = vst [vmem:[#allocation2 + $0x38] sm:$0xff] %v187
    %192 = vrot.lane.b32.xlu0 %v110, 15
    %v193 = vpop.permute.xlu0 %192
    %194 = vrot.lane.b32.xlu0 0.0, 15
    %v195 = vpop.permute.xlu0 %194
    %196 = vrot.lane.b32.xlu0 %v111, 15
    %v197 = vpop.permute.xlu0 %196
    %198 = vrot.lane.b32.xlu0 %v112, 15
    %v199 = vpop.permute.xlu0 %198
    %200 = vrot.lane.b32.xlu0 %v113, 15
    %v201 = vpop.permute.xlu0 %200
    %vm202 = vcmp.lt.s32.totalorder %v55, 15
    %v203 = vsel %vm202, %v199, %v201
    %v204 = vsel %vm202, %v197, %v199
    %v205 = vsel %vm202, %v193, %v197
    %v206 = vsel %vm202, %v201, %v193
    %v207 = vsel %vm83, 1, 0
    %v208 = vsel %vm84, 1, 0
    %v209 = vsel %vm85, 1, 0
    %v210 = vsel %vm86, 1, 0
    %vm211 = vcmp.eq.s32.totalorder %v207, 1
    %vm212 = vcmp.eq.s32.totalorder %v208, 1
    %vm213 = vcmp.eq.s32.totalorder %v209, 1
    %vm214 = vcmp.eq.s32.totalorder %v210, 1
    %v215 = vsel %vm211, %v206, 0.0
    %v216 = vsel %vm212, %v205, 0.0
    %v217 = vsel %vm213, %v204, 0.0
    %v218 = vsel %vm214, %v203, 0.0
    %v219 = vsel %vm211, %v195, 0.0
    %v220 = vsel %vm212, %v195, 0.0
    %v221 = vsel %vm213, %v195, 0.0
    %v222 = vsel %vm214, %v195, 0.0
    %v223 = vpack.c.bf16 %v219, %v215
    %v224 = vpack.c.bf16 %v220, %v216
    %v225 = vpack.c.bf16 %v221, %v217
    %v226 = vpack.c.bf16 %v222, %v218
    %227 = vst [vmem:[#allocation2 + $0x40] sm:$0xff] %v223
    %228 = vst [vmem:[#allocation2 + $0x48] sm:$0xff] %v224
    %229 = vst [vmem:[#allocation2 + $0x50] sm:$0xff] %v225
    %230 = vst [vmem:[#allocation2 + $0x58] sm:$0xff] %v226
    %231 = vrot.lane.b32.xlu0 %v110, 1
    %v232 = vpop.permute.xlu0 %231
    %233 = vrot.lane.b32.xlu0 0.0, 1
    %v234 = vpop.permute.xlu0 %233
    %235 = vrot.lane.b32.xlu0 %v111, 1
    %v236 = vpop.permute.xlu0 %235
    %237 = vrot.lane.b32.xlu0 %v112, 1
    %v238 = vpop.permute.xlu0 %237
    %239 = vrot.lane.b32.xlu0 %v113, 1
    %v240 = vpop.permute.xlu0 %239
    %vm241 = vcmp.lt.s32.totalorder %v55, 1
    %v242 = vsel %vm241, %v238, %v240
    %v243 = vsel %vm241, %v236, %v238
    %v244 = vsel %vm241, %v232, %v236
    %v245 = vsel %vm241, %v240, %v232
    %v246 = vsel %vm71, 1, 0
    %v247 = vsel %vm72, 1, 0
    %v248 = vsel %vm73, 1, 0
    %v249 = vsel %vm74, 1, 0
    %vm250 = vcmp.eq.s32.totalorder %v246, 1
    %vm251 = vcmp.eq.s32.totalorder %v247, 1
    %vm252 = vcmp.eq.s32.totalorder %v248, 1
    %vm253 = vcmp.eq.s32.totalorder %v249, 1
    %v254 = vsel %vm250, %v245, 0.0
    %v255 = vsel %vm251, %v244, 0.0
    %v256 = vsel %vm252, %v243, 0.0
    %v257 = vsel %vm253, %v242, 0.0
    %v258 = vsel %vm250, %v234, 0.0
    %v259 = vsel %vm251, %v234, 0.0
    %v260 = vsel %vm252, %v234, 0.0
    %v261 = vsel %vm253, %v234, 0.0
    %v262 = vpack.c.bf16 %v258, %v254
    %v263 = vpack.c.bf16 %v259, %v255
    %v264 = vpack.c.bf16 %v260, %v256
    %v265 = vpack.c.bf16 %v261, %v257
    %266 = vst [vmem:[#allocation2 + $0x60] sm:$0xff] %v262
    %267 = vst [vmem:[#allocation2 + $0x68] sm:$0xff] %v263
    %268 = vst [vmem:[#allocation2 + $0x70] sm:$0xff] %v264
    %269 = vst [vmem:[#allocation2 + $0x78] sm:$0xff] %v265
    %v270 = vpack.c.bf16 0.0, %v110
    %v271 = vpack.c.bf16 0.0, %v111
    %v272 = vpack.c.bf16 0.0, %v112
    %v273 = vpack.c.bf16 0.0, %v113
    %274 = vst [vmem:[#allocation2 + $0x80] sm:$0xff] %v270
    %275 = vst [vmem:[#allocation2 + $0x88] sm:$0xff] %v271
    %276 = vst [vmem:[#allocation2 + $0x90] sm:$0xff] %v272
    %277 = vst [vmem:[#allocation2 + $0x98] sm:$0xff] %v273
    %278 = vrot.lane.b32.xlu0 %v110, 127
    %v279 = vpop.permute.xlu0 %278
    %280 = vrot.lane.b32.xlu0 0.0, 127
    %v281 = vpop.permute.xlu0 %280
    %282 = vrot.lane.b32.xlu0 %v111, 127
    %v283 = vpop.permute.xlu0 %282
    %284 = vrot.lane.b32.xlu0 %v112, 127
    %v285 = vpop.permute.xlu0 %284
    %286 = vrot.lane.b32.xlu0 %v113, 127
    %v287 = vpop.permute.xlu0 %286
    %vm288 = vcmp.lt.s32.totalorder %v55, 127
    %v289 = vsel %vm288, %v285, %v287
    %v290 = vsel %vm288, %v283, %v285
    %v291 = vsel %vm288, %v279, %v283
    %v292 = vsel %vm288, %v287, %v279
    %v293 = vsel %vm79, 1, 0
    %v294 = vsel %vm80, 1, 0
    %v295 = vsel %vm81, 1, 0
    %v296 = vsel %vm82, 1, 0
    %vm297 = vcmp.eq.s32.totalorder %v293, 1
    %vm298 = vcmp.eq.s32.totalorder %v294, 1
    %vm299 = vcmp.eq.s32.totalorder %v295, 1
    %vm300 = vcmp.eq.s32.totalorder %v296, 1
    %v301 = vsel %vm297, %v291, 0.0
    %v302 = vsel %vm298, %v290, 0.0
    %v303 = vsel %vm299, %v289, 0.0
    %v304 = vsel %vm300, %v292, 0.0
    %v305 = vsel %vm297, %v281, 0.0
    %v306 = vsel %vm298, %v281, 0.0
    %v307 = vsel %vm299, %v281, 0.0
    %v308 = vsel %vm300, %v281, 0.0
    %v309 = vpack.c.bf16 %v305, %v301
    %v310 = vpack.c.bf16 %v306, %v302
    %v311 = vpack.c.bf16 %v307, %v303
    %v312 = vpack.c.bf16 %v308, %v304
    %313 = vst [vmem:[#allocation2 + $0xa0] sm:$0xff] %v309
    %314 = vst [vmem:[#allocation2 + $0xa8] sm:$0xff] %v310
    %315 = vst [vmem:[#allocation2 + $0xb0] sm:$0xff] %v311
    %316 = vst [vmem:[#allocation2 + $0xb8] sm:$0xff] %v312
    %317 = vrot.lane.b32.xlu0 %v110, 113
    %v318 = vpop.permute.xlu0 %317
    %319 = vrot.lane.b32.xlu0 0.0, 113
    %v320 = vpop.permute.xlu0 %319
    %321 = vrot.lane.b32.xlu0 %v111, 113
    %v322 = vpop.permute.xlu0 %321
    %323 = vrot.lane.b32.xlu0 %v112, 113
    %v324 = vpop.permute.xlu0 %323
    %325 = vrot.lane.b32.xlu0 %v113, 113
    %v326 = vpop.permute.xlu0 %325
    %vm327 = vcmp.lt.s32.totalorder %v55, 113
    %v328 = vsel %vm327, %v324, %v326
    %v329 = vsel %vm327, %v322, %v324
    %v330 = vsel %vm327, %v318, %v322
    %v331 = vsel %vm327, %v326, %v318
    %v332 = vsel %vm91, 1, 0
    %v333 = vsel %vm92, 1, 0
    %v334 = vsel %vm93, 1, 0
    %v335 = vsel %vm94, 1, 0
    %vm336 = vcmp.eq.s32.totalorder %v332, 1
    %vm337 = vcmp.eq.s32.totalorder %v333, 1
    %vm338 = vcmp.eq.s32.totalorder %v334, 1
    %vm339 = vcmp.eq.s32.totalorder %v335, 1
    %v340 = vsel %vm336, %v330, 0.0
    %v341 = vsel %vm337, %v329, 0.0
    %v342 = vsel %vm338, %v328, 0.0
    %v343 = vsel %vm339, %v331, 0.0
    %v344 = vsel %vm336, %v320, 0.0
    %v345 = vsel %vm337, %v320, 0.0
    %v346 = vsel %vm338, %v320, 0.0
    %v347 = vsel %vm339, %v320, 0.0
    %v348 = vpack.c.bf16 %v344, %v340
    %v349 = vpack.c.bf16 %v345, %v341
    %v350 = vpack.c.bf16 %v346, %v342
    %v351 = vpack.c.bf16 %v347, %v343
    %352 = vst [vmem:[#allocation2 + $0xc0] sm:$0xff] %v348
    %353 = vst [vmem:[#allocation2 + $0xc8] sm:$0xff] %v349
    %354 = vst [vmem:[#allocation2 + $0xd0] sm:$0xff] %v350
    %355 = vst [vmem:[#allocation2 + $0xd8] sm:$0xff] %v351
    %356 = vrot.lane.b32.xlu0 %v110, 112
    %v357 = vpop.permute.xlu0 %356
    %358 = vrot.lane.b32.xlu0 0.0, 112
    %v359 = vpop.permute.xlu0 %358
    %360 = vrot.lane.b32.xlu0 %v111, 112
    %v361 = vpop.permute.xlu0 %360
    %362 = vrot.lane.b32.xlu0 %v112, 112
    %v363 = vpop.permute.xlu0 %362
    %364 = vrot.lane.b32.xlu0 %v113, 112
    %v365 = vpop.permute.xlu0 %364
    %vm366 = vcmp.lt.s32.totalorder %v55, 112
    %v367 = vsel %vm366, %v363, %v365
    %v368 = vsel %vm366, %v361, %v363
    %v369 = vsel %vm366, %v357, %v361
    %v370 = vsel %vm366, %v365, %v357
    %v371 = vsel %vm87, 1, 0
    %v372 = vsel %vm88, 1, 0
    %v373 = vsel %vm89, 1, 0
    %v374 = vsel %vm90, 1, 0
    %vm375 = vcmp.eq.s32.totalorder %v371, 1
    %vm376 = vcmp.eq.s32.totalorder %v372, 1
    %vm377 = vcmp.eq.s32.totalorder %v373, 1
    %vm378 = vcmp.eq.s32.totalorder %v374, 1
    %v379 = vsel %vm375, %v369, 0.0
    %v380 = vsel %vm376, %v368, 0.0
    %v381 = vsel %vm377, %v367, 0.0
    %v382 = vsel %vm378, %v370, 0.0
    %v383 = vsel %vm375, %v359, 0.0
    %v384 = vsel %vm376, %v359, 0.0
    %v385 = vsel %vm377, %v359, 0.0
    %v386 = vsel %vm378, %v359, 0.0
    %v387 = vpack.c.bf16 %v383, %v379
    %v388 = vpack.c.bf16 %v384, %v380
    %v389 = vpack.c.bf16 %v385, %v381
    %v390 = vpack.c.bf16 %v386, %v382
    %391 = vst [vmem:[#allocation2 + $0xe0] sm:$0xff] %v387
    %392 = vst [vmem:[#allocation2 + $0xe8] sm:$0xff] %v388
    %393 = vst [vmem:[#allocation2 + $0xf0] sm:$0xff] %v389
    %394 = vst [vmem:[#allocation2 + $0xf8] sm:$0xff] %v390
    %395 = vrot.lane.b32.xlu0 %v110, 111
    %v396 = vpop.permute.xlu0 %395
    %397 = vrot.lane.b32.xlu0 0.0, 111
    %v398 = vpop.permute.xlu0 %397
    %399 = vrot.lane.b32.xlu0 %v111, 111
    %v400 = vpop.permute.xlu0 %399
    %401 = vrot.lane.b32.xlu0 %v112, 111
    %v402 = vpop.permute.xlu0 %401
    %403 = vrot.lane.b32.xlu0 %v113, 111
    %v404 = vpop.permute.xlu0 %403
    %vm405 = vcmp.lt.s32.totalorder %v55, 111
    %v406 = vsel %vm405, %v402, %v404
    %v407 = vsel %vm405, %v400, %v402
    %v408 = vsel %vm405, %v396, %v400
    %v409 = vsel %vm405, %v404, %v396
    %v410 = vsel %vm95, 1, 0
    %v411 = vsel %vm96, 1, 0
    %v412 = vsel %vm97, 1, 0
    %v413 = vsel %vm98, 1, 0
    %vm414 = vcmp.eq.s32.totalorder %v410, 1
    %vm415 = vcmp.eq.s32.totalorder %v411, 1
    %vm416 = vcmp.eq.s32.totalorder %v412, 1
    %vm417 = vcmp.eq.s32.totalorder %v413, 1
    %v418 = vsel %vm414, %v408, 0.0
    %v419 = vsel %vm415, %v407, 0.0
    %v420 = vsel %vm416, %v406, 0.0
    %v421 = vsel %vm417, %v409, 0.0
    %v422 = vsel %vm414, %v398, 0.0
    %v423 = vsel %vm415, %v398, 0.0
    %v424 = vsel %vm416, %v398, 0.0
    %v425 = vsel %vm417, %v398, 0.0
    %v426 = vpack.c.bf16 %v422, %v418
    %v427 = vpack.c.bf16 %v423, %v419
    %v428 = vpack.c.bf16 %v424, %v420
    %v429 = vpack.c.bf16 %v425, %v421
    %430 = vst [vmem:[#allocation2 + $0x100] sm:$0xff] %v426
    %431 = vst [vmem:[#allocation2 + $0x108] sm:$0xff] %v427
    %432 = vst [vmem:[#allocation2 + $0x110] sm:$0xff] %v428
    %433 = vst [vmem:[#allocation2 + $0x118] sm:$0xff] %v429
    %v434 = vld [vmem:[#allocation6] sm:$0xf]
    %v435 = vld [vmem:[#allocation2] sm:$0xff]
    %v436 = vld [vmem:[#allocation2 + $0x8] sm:$0xff]
    %v437 = vld [vmem:[#allocation2 + $0x10] sm:$0xff]
    %v438 = vld [vmem:[#allocation2 + $0x18] sm:$0xff]
    %v439 = vld [vmem:[#allocation2 + $0x20] sm:$0xff]
    %v440 = vld [vmem:[#allocation2 + $0x28] sm:$0xff]
    %v441 = vld [vmem:[#allocation2 + $0x30] sm:$0xff]
    %v442 = vld [vmem:[#allocation2 + $0x38] sm:$0xff]
    %v443 = vld [vmem:[#allocation2 + $0x40] sm:$0xff]
    %v444 = vld [vmem:[#allocation2 + $0x48] sm:$0xff]
    %v445 = vld [vmem:[#allocation2 + $0x50] sm:$0xff]
    %v446 = vld [vmem:[#allocation2 + $0x58] sm:$0xff]
    %v447 = vld [vmem:[#allocation2 + $0x60] sm:$0xff]
    %v448 = vld [vmem:[#allocation2 + $0x68] sm:$0xff]
    %v449 = vld [vmem:[#allocation2 + $0x70] sm:$0xff]
    %v450 = vld [vmem:[#allocation2 + $0x78] sm:$0xff]
    %v451 = vld [vmem:[#allocation2 + $0x80] sm:$0xff]
    %v452 = vld [vmem:[#allocation2 + $0x88] sm:$0xff]
    %v453 = vld [vmem:[#allocation2 + $0x90] sm:$0xff]
    %v454 = vld [vmem:[#allocation2 + $0x98] sm:$0xff]
    %v455 = vld [vmem:[#allocation2 + $0xa0] sm:$0xff]
    %v456 = vld [vmem:[#allocation2 + $0xa8] sm:$0xff]
    %v457 = vld [vmem:[#allocation2 + $0xb0] sm:$0xff]
    %v458 = vld [vmem:[#allocation2 + $0xb8] sm:$0xff]
    %v459 = vld [vmem:[#allocation2 + $0xc0] sm:$0xff]
    %v460 = vld [vmem:[#allocation2 + $0xc8] sm:$0xff]
    %v461 = vld [vmem:[#allocation2 + $0xd0] sm:$0xff]
    %v462 = vld [vmem:[#allocation2 + $0xd8] sm:$0xff]
    %v463 = vld [vmem:[#allocation2 + $0xe0] sm:$0xff]
    %v464 = vld [vmem:[#allocation2 + $0xe8] sm:$0xff]
    %v465 = vld [vmem:[#allocation2 + $0xf0] sm:$0xff]
    %v466 = vld [vmem:[#allocation2 + $0xf8] sm:$0xff]
    %v467 = vld [vmem:[#allocation2 + $0x100] sm:$0xff]
    %v468 = vld [vmem:[#allocation2 + $0x108] sm:$0xff]
    %v469 = vld [vmem:[#allocation2 + $0x110] sm:$0xff]
    %v470 = vld [vmem:[#allocation2 + $0x118] sm:$0xff]
    %v473 = vunpack.c.l.s4 1983009808
    %v474 = vunpack.c.0.s8 %v473
    %v475 = vlaneseq
    %v476 = vshrl.u32 %v475, 7
    %v477 = vsub.s32 %v474, %v476
    %v478 = vrot.slane %v434, %v477
    %v479 = vcombine.high %v478, %v478
    %vm481 = vcmask 130048
    %v483 = vsel %vm481, %v479, 0
    %485 = vmatprep.subr.bf16.mxu0 %v436
    %486 = vmatpush1.bf16.msra.mxu0 %v435
    %487 = vmatprep.subr.bf16.mxu0 %v440
    %488 = vmatpush1.bf16.msra.mxu0 %v439
    %489 = vmatprep.subr.bf16.mxu0 %v444
    %490 = vmatpush1.bf16.msra.mxu0 %v443
    %491 = vmatprep.subr.bf16.mxu0 %v448
    %492 = vmatpush1.bf16.msra.mxu0 %v447
    %493 = vmatprep.subr.bf16.mxu0 %v452
    %494 = vmatpush1.bf16.msra.mxu0 %v451
    %495 = vmatprep.subr.bf16.mxu0 %v456
    %496 = vmatpush1.bf16.msra.mxu0 %v455
    %497 = vmatprep.subr.bf16.mxu0 %v460
    %498 = vmatpush1.bf16.msra.mxu0 %v459
    %499 = vmatprep.subr.bf16.mxu0 %v464
    %500 = vmatpush1.bf16.msra.mxu0 %v463
    %501 = vmatprep.subr.bf16.mxu0 %v468
    %502 = vmatpush1.bf16.msra.mxu0 %v467
    %503 = vmatprep.subr.bf16.mxu0 0
    %504 = vmatpush1.bf16.msra.mxu0 0
    %505 = vmatprep.subr.bf16.mxu0 0
    %506 = vmatpush1.bf16.msra.mxu0 0
    %507 = vmatprep.subr.bf16.mxu0 0
    %508 = vmatpush1.bf16.msra.mxu0 0
    %509 = vmatprep.subr.bf16.mxu0 0
    %510 = vmatpush1.bf16.msra.mxu0 0
    %511 = vmatprep.subr.bf16.mxu0 0
    %512 = vmatpush1.bf16.msra.mxu0 0
    %513 = vmatprep.subr.bf16.mxu0 0
    %514 = vmatpush1.bf16.msra.mxu0 0
    %515 = vmatprep.subr.bf16.mxu0 0
    %516 = vmatpush1.bf16.msra.mxu0 0
    %517 = vmatprep.mubr.bf16.mxu0 %v483
    %518 = vmatmul.mubr.bf16.gmra.mrb[0].mxu0 %v478
    %v519 = vpop.f32.mrb[0].mxu0
    %v520 = vadd.f32 0.0, %v519
    %v521 = vpop.f32.mrb[0].mxu0
    %v522 = vadd.f32 0.0, %v521
    %v523 = vpop.f32.mrb[0].mxu0
    %v524 = vpop.f32.mrb[0].mxu0
    %525 = vdwg.mxu0
    %526 = vmatprep.subr.bf16.mxu0 %v438
    %527 = vmatpush1.bf16.msra.mxu0 %v437
    %528 = vmatprep.subr.bf16.mxu0 %v442
    %529 = vmatpush1.bf16.msra.mxu0 %v441
    %530 = vmatprep.subr.bf16.mxu0 %v446
    %531 = vmatpush1.bf16.msra.mxu0 %v445
    %532 = vmatprep.subr.bf16.mxu0 %v450
    %533 = vmatpush1.bf16.msra.mxu0 %v449
    %534 = vmatprep.subr.bf16.mxu0 %v454
    %535 = vmatpush1.bf16.msra.mxu0 %v453
    %536 = vmatprep.subr.bf16.mxu0 %v458
    %537 = vmatpush1.bf16.msra.mxu0 %v457
    %538 = vmatprep.subr.bf16.mxu0 %v462
    %539 = vmatpush1.bf16.msra.mxu0 %v461
    %540 = vmatprep.subr.bf16.mxu0 %v466
    %541 = vmatpush1.bf16.msra.mxu0 %v465
    %542 = vmatprep.subr.bf16.mxu0 %v470
    %543 = vmatpush1.bf16.msra.mxu0 %v469
    %544 = vmatprep.subr.bf16.mxu0 0
    %545 = vmatpush1.bf16.msra.mxu0 0
    %546 = vmatprep.subr.bf16.mxu0 0
    %547 = vmatpush1.bf16.msra.mxu0 0
    %548 = vmatprep.subr.bf16.mxu0 0
    %549 = vmatpush1.bf16.msra.mxu0 0
    %550 = vmatprep.subr.bf16.mxu0 0
    %551 = vmatpush1.bf16.msra.mxu0 0
    %552 = vmatprep.subr.bf16.mxu0 0
    %553 = vmatpush1.bf16.msra.mxu0 0
    %554 = vmatprep.subr.bf16.mxu0 0
    %555 = vmatpush1.bf16.msra.mxu0 0
    %556 = vmatprep.subr.bf16.mxu0 0
    %557 = vmatpush1.bf16.msra.mxu0 0
    %558 = vmatprep.mubr.bf16.mxu0 %v483
    %559 = vmatmul.mubr.bf16.gmra.mrb[0].mxu0 %v478
    %v560 = vpop.f32.mrb[0].mxu0
    %v561 = vadd.f32 0.0, %v560
    %v562 = vpop.f32.mrb[0].mxu0
    %v563 = vadd.f32 0.0, %v562
    %v564 = vpop.f32.mrb[0].mxu0
    %v565 = vpop.f32.mrb[0].mxu0
    %566 = vdwg.mxu0
    %568 = vset.pattern.permute.xlu0 0
    %569 = vperm.xlu0 %568, %v108
    %v570 = vpop.permute.xlu0 %569
    %v572 = vmul.f32 %v520, %v570
    %v573 = vmul.f32 %v522, %v570
    %v574 = vmul.f32 %v561, %v570
    %v575 = vmul.f32 %v563, %v570
    %576 = vset.pattern.permute.xlu0 1
    %577 = vperm.xlu0 %576, %v108
    %v578 = vpop.permute.xlu0 %577
    %v580 = vadd.f32 %v572, %v578
    %v581 = vadd.f32 %v573, %v578
    %v582 = vadd.f32 %v574, %v578
    %v583 = vadd.f32 %v575, %v578
    %v584 = vmax.f32 %v580, 0.0
    %v585 = vmax.f32 %v581, 0.0
    %v586 = vmax.f32 %v582, 0.0
    %v587 = vmax.f32 %v583, 0.0
    %v588 = vsel %vm109, %v584, 0.0
    %v589 = vsel %vm109, %v585, 0.0
    %v590 = vsel %vm109, %v586, 0.0
    %v591 = vsel %vm109, %v587, 0.0
    %592 = vrot.lane.b32.xlu0 %v588, 17
    %v593 = vpop.permute.xlu0 %592
    %594 = vrot.lane.b32.xlu0 %v589, 17
    %v595 = vpop.permute.xlu0 %594
    %596 = vrot.lane.b32.xlu0 %v590, 17
    %v597 = vpop.permute.xlu0 %596
    %598 = vrot.lane.b32.xlu0 %v591, 17
    %v599 = vpop.permute.xlu0 %598
    %v600 = vsel %vm124, %v597, %v599
    %v601 = vsel %vm124, %v595, %v597
    %v602 = vsel %vm124, %v593, %v595
    %v603 = vsel %vm124, %v599, %v593
    %v604 = vsel %vm133, %v603, 0.0
    %v605 = vsel %vm134, %v602, 0.0
    %v606 = vsel %vm135, %v601, 0.0
    %v607 = vsel %vm136, %v600, 0.0
    %v608 = vpack.c.bf16 %v141, %v604
    %v609 = vpack.c.bf16 %v142, %v605
    %v610 = vpack.c.bf16 %v143, %v606
    %v611 = vpack.c.bf16 %v144, %v607
    %612 = vst [vmem:[#allocation2] sm:$0xff] %v608
    %613 = vst [vmem:[#allocation2 + $0x8] sm:$0xff] %v609
    %614 = vst [vmem:[#allocation2 + $0x10] sm:$0xff] %v610
    %615 = vst [vmem:[#allocation2 + $0x18] sm:$0xff] %v611
    %616 = vrot.lane.b32.xlu0 %v588, 16
    %v617 = vpop.permute.xlu0 %616
    %618 = vrot.lane.b32.xlu0 %v589, 16
    %v619 = vpop.permute.xlu0 %618
    %620 = vrot.lane.b32.xlu0 %v590, 16
    %v621 = vpop.permute.xlu0 %620
    %622 = vrot.lane.b32.xlu0 %v591, 16
    %v623 = vpop.permute.xlu0 %622
    %v624 = vsel %vm163, %v621, %v623
    %v625 = vsel %vm163, %v619, %v621
    %v626 = vsel %vm163, %v617, %v619
    %v627 = vsel %vm163, %v623, %v617
    %v628 = vsel %vm172, %v627, 0.0
    %v629 = vsel %vm173, %v626, 0.0
    %v630 = vsel %vm174, %v625, 0.0
    %v631 = vsel %vm175, %v624, 0.0
    %v632 = vpack.c.bf16 %v180, %v628
    %v633 = vpack.c.bf16 %v181, %v629
    %v634 = vpack.c.bf16 %v182, %v630
    %v635 = vpack.c.bf16 %v183, %v631
    %636 = vst [vmem:[#allocation2 + $0x20] sm:$0xff] %v632
    %637 = vst [vmem:[#allocation2 + $0x28] sm:$0xff] %v633
    %638 = vst [vmem:[#allocation2 + $0x30] sm:$0xff] %v634
    %639 = vst [vmem:[#allocation2 + $0x38] sm:$0xff] %v635
    %640 = vrot.lane.b32.xlu0 %v588, 15
    %v641 = vpop.permute.xlu0 %640
    %642 = vrot.lane.b32.xlu0 %v589, 15
    %v643 = vpop.permute.xlu0 %642
    %644 = vrot.lane.b32.xlu0 %v590, 15
    %v645 = vpop.permute.xlu0 %644
    %646 = vrot.lane.b32.xlu0 %v591, 15
    %v647 = vpop.permute.xlu0 %646
    %v648 = vsel %vm202, %v645, %v647
    %v649 = vsel %vm202, %v643, %v645
    %v650 = vsel %vm202, %v641, %v643
    %v651 = vsel %vm202, %v647, %v641
    %v652 = vsel %vm211, %v651, 0.0
    %v653 = vsel %vm212, %v650, 0.0
    %v654 = vsel %vm213, %v649, 0.0
    %v655 = vsel %vm214, %v648, 0.0
    %v656 = vpack.c.bf16 %v219, %v652
    %v657 = vpack.c.bf16 %v220, %v653
    %v658 = vpack.c.bf16 %v221, %v654
    %v659 = vpack.c.bf16 %v222, %v655
    %660 = vst [vmem:[#allocation2 + $0x40] sm:$0xff] %v656
    %661 = vst [vmem:[#allocation2 + $0x48] sm:$0xff] %v657
    %662 = vst [vmem:[#allocation2 + $0x50] sm:$0xff] %v658
    %663 = vst [vmem:[#allocation2 + $0x58] sm:$0xff] %v659
    %664 = vrot.lane.b32.xlu0 %v588, 1
    %v665 = vpop.permute.xlu0 %664
    %666 = vrot.lane.b32.xlu0 %v589, 1
    %v667 = vpop.permute.xlu0 %666
    %668 = vrot.lane.b32.xlu0 %v590, 1
    %v669 = vpop.permute.xlu0 %668
    %670 = vrot.lane.b32.xlu0 %v591, 1
    %v671 = vpop.permute.xlu0 %670
    %v672 = vsel %vm241, %v669, %v671
    %v673 = vsel %vm241, %v667, %v669
    %v674 = vsel %vm241, %v665, %v667
    %v675 = vsel %vm241, %v671, %v665
    %v676 = vsel %vm250, %v675, 0.0
    %v677 = vsel %vm251, %v674, 0.0
    %v678 = vsel %vm252, %v673, 0.0
    %v679 = vsel %vm253, %v672, 0.0
    %v680 = vpack.c.bf16 %v258, %v676
    %v681 = vpack.c.bf16 %v259, %v677
    %v682 = vpack.c.bf16 %v260, %v678
    %v683 = vpack.c.bf16 %v261, %v679
    %684 = vst [vmem:[#allocation2 + $0x60] sm:$0xff] %v680
    %685 = vst [vmem:[#allocation2 + $0x68] sm:$0xff] %v681
    %686 = vst [vmem:[#allocation2 + $0x70] sm:$0xff] %v682
    %687 = vst [vmem:[#allocation2 + $0x78] sm:$0xff] %v683
    %v688 = vpack.c.bf16 0.0, %v588
    %v689 = vpack.c.bf16 0.0, %v589
    %v690 = vpack.c.bf16 0.0, %v590
    %v691 = vpack.c.bf16 0.0, %v591
    %692 = vst [vmem:[#allocation2 + $0x80] sm:$0xff] %v688
    %693 = vst [vmem:[#allocation2 + $0x88] sm:$0xff] %v689
    %694 = vst [vmem:[#allocation2 + $0x90] sm:$0xff] %v690
    %695 = vst [vmem:[#allocation2 + $0x98] sm:$0xff] %v691
    %696 = vrot.lane.b32.xlu0 %v588, 127
    %v697 = vpop.permute.xlu0 %696
    %698 = vrot.lane.b32.xlu0 %v589, 127
    %v699 = vpop.permute.xlu0 %698
    %700 = vrot.lane.b32.xlu0 %v590, 127
    %v701 = vpop.permute.xlu0 %700
    %702 = vrot.lane.b32.xlu0 %v591, 127
    %v703 = vpop.permute.xlu0 %702
    %v704 = vsel %vm288, %v701, %v703
    %v705 = vsel %vm288, %v699, %v701
    %v706 = vsel %vm288, %v697, %v699
    %v707 = vsel %vm288, %v703, %v697
    %v708 = vsel %vm297, %v706, 0.0
    %v709 = vsel %vm298, %v705, 0.0
    %v710 = vsel %vm299, %v704, 0.0
    %v711 = vsel %vm300, %v707, 0.0
    %v712 = vpack.c.bf16 %v305, %v708
    %v713 = vpack.c.bf16 %v306, %v709
    %v714 = vpack.c.bf16 %v307, %v710
    %v715 = vpack.c.bf16 %v308, %v711
    %716 = vst [vmem:[#allocation2 + $0xa0] sm:$0xff] %v712
    %717 = vst [vmem:[#allocation2 + $0xa8] sm:$0xff] %v713
    %718 = vst [vmem:[#allocation2 + $0xb0] sm:$0xff] %v714
    %719 = vst [vmem:[#allocation2 + $0xb8] sm:$0xff] %v715
    %720 = vrot.lane.b32.xlu0 %v588, 113
    %v721 = vpop.permute.xlu0 %720
    %722 = vrot.lane.b32.xlu0 %v589, 113
    %v723 = vpop.permute.xlu0 %722
    %724 = vrot.lane.b32.xlu0 %v590, 113
    %v725 = vpop.permute.xlu0 %724
    %726 = vrot.lane.b32.xlu0 %v591, 113
    %v727 = vpop.permute.xlu0 %726
    %v728 = vsel %vm327, %v725, %v727
    %v729 = vsel %vm327, %v723, %v725
    %v730 = vsel %vm327, %v721, %v723
    %v731 = vsel %vm327, %v727, %v721
    %v732 = vsel %vm336, %v730, 0.0
    %v733 = vsel %vm337, %v729, 0.0
    %v734 = vsel %vm338, %v728, 0.0
    %v735 = vsel %vm339, %v731, 0.0
    %v736 = vpack.c.bf16 %v344, %v732
    %v737 = vpack.c.bf16 %v345, %v733
    %v738 = vpack.c.bf16 %v346, %v734
    %v739 = vpack.c.bf16 %v347, %v735
    %740 = vst [vmem:[#allocation2 + $0xc0] sm:$0xff] %v736
    %741 = vst [vmem:[#allocation2 + $0xc8] sm:$0xff] %v737
    %742 = vst [vmem:[#allocation2 + $0xd0] sm:$0xff] %v738
    %743 = vst [vmem:[#allocation2 + $0xd8] sm:$0xff] %v739
    %744 = vrot.lane.b32.xlu0 %v588, 112
    %v745 = vpop.permute.xlu0 %744
    %746 = vrot.lane.b32.xlu0 %v589, 112
    %v747 = vpop.permute.xlu0 %746
    %748 = vrot.lane.b32.xlu0 %v590, 112
    %v749 = vpop.permute.xlu0 %748
    %750 = vrot.lane.b32.xlu0 %v591, 112
    %v751 = vpop.permute.xlu0 %750
    %v752 = vsel %vm366, %v749, %v751
    %v753 = vsel %vm366, %v747, %v749
    %v754 = vsel %vm366, %v745, %v747
    %v755 = vsel %vm366, %v751, %v745
    %v756 = vsel %vm375, %v754, 0.0
    %v757 = vsel %vm376, %v753, 0.0
    %v758 = vsel %vm377, %v752, 0.0
    %v759 = vsel %vm378, %v755, 0.0
    %v760 = vpack.c.bf16 %v383, %v756
    %v761 = vpack.c.bf16 %v384, %v757
    %v762 = vpack.c.bf16 %v385, %v758
    %v763 = vpack.c.bf16 %v386, %v759
    %764 = vst [vmem:[#allocation2 + $0xe0] sm:$0xff] %v760
    %765 = vst [vmem:[#allocation2 + $0xe8] sm:$0xff] %v761
    %766 = vst [vmem:[#allocation2 + $0xf0] sm:$0xff] %v762
    %767 = vst [vmem:[#allocation2 + $0xf8] sm:$0xff] %v763
    %768 = vrot.lane.b32.xlu0 %v588, 111
    %v769 = vpop.permute.xlu0 %768
    %770 = vrot.lane.b32.xlu0 %v589, 111
    %v771 = vpop.permute.xlu0 %770
    %772 = vrot.lane.b32.xlu0 %v590, 111
    %v773 = vpop.permute.xlu0 %772
    %774 = vrot.lane.b32.xlu0 %v591, 111
    %v775 = vpop.permute.xlu0 %774
    %v776 = vsel %vm405, %v773, %v775
    %v777 = vsel %vm405, %v771, %v773
    %v778 = vsel %vm405, %v769, %v771
    %v779 = vsel %vm405, %v775, %v769
    %v780 = vsel %vm414, %v778, 0.0
    %v781 = vsel %vm415, %v777, 0.0
    %v782 = vsel %vm416, %v776, 0.0
    %v783 = vsel %vm417, %v779, 0.0
    %v784 = vpack.c.bf16 %v422, %v780
    %v785 = vpack.c.bf16 %v423, %v781
    %v786 = vpack.c.bf16 %v424, %v782
    %v787 = vpack.c.bf16 %v425, %v783
    %788 = vst [vmem:[#allocation2 + $0x100] sm:$0xff] %v784
    %789 = vst [vmem:[#allocation2 + $0x108] sm:$0xff] %v785
    %790 = vst [vmem:[#allocation2 + $0x110] sm:$0xff] %v786
    %791 = vst [vmem:[#allocation2 + $0x118] sm:$0xff] %v787
    %v792 = vld [vmem:[%s2] sm:$0xf]
    %v793 = vld [vmem:[#allocation2] sm:$0xff]
    %v794 = vld [vmem:[#allocation2 + $0x8] sm:$0xff]
    %v795 = vld [vmem:[#allocation2 + $0x10] sm:$0xff]
    %v796 = vld [vmem:[#allocation2 + $0x18] sm:$0xff]
    %v797 = vld [vmem:[#allocation2 + $0x20] sm:$0xff]
    %v798 = vld [vmem:[#allocation2 + $0x28] sm:$0xff]
    %v799 = vld [vmem:[#allocation2 + $0x30] sm:$0xff]
    %v800 = vld [vmem:[#allocation2 + $0x38] sm:$0xff]
    %v801 = vld [vmem:[#allocation2 + $0x40] sm:$0xff]
    %v802 = vld [vmem:[#allocation2 + $0x48] sm:$0xff]
    %v803 = vld [vmem:[#allocation2 + $0x50] sm:$0xff]
    %v804 = vld [vmem:[#allocation2 + $0x58] sm:$0xff]
    %v805 = vld [vmem:[#allocation2 + $0x60] sm:$0xff]
    %v806 = vld [vmem:[#allocation2 + $0x68] sm:$0xff]
    %v807 = vld [vmem:[#allocation2 + $0x70] sm:$0xff]
    %v808 = vld [vmem:[#allocation2 + $0x78] sm:$0xff]
    %v809 = vld [vmem:[#allocation2 + $0x80] sm:$0xff]
    %v810 = vld [vmem:[#allocation2 + $0x88] sm:$0xff]
    %v811 = vld [vmem:[#allocation2 + $0x90] sm:$0xff]
    %v812 = vld [vmem:[#allocation2 + $0x98] sm:$0xff]
    %v813 = vld [vmem:[#allocation2 + $0xa0] sm:$0xff]
    %v814 = vld [vmem:[#allocation2 + $0xa8] sm:$0xff]
    %v815 = vld [vmem:[#allocation2 + $0xb0] sm:$0xff]
    %v816 = vld [vmem:[#allocation2 + $0xb8] sm:$0xff]
    %v817 = vld [vmem:[#allocation2 + $0xc0] sm:$0xff]
    %v818 = vld [vmem:[#allocation2 + $0xc8] sm:$0xff]
    %v819 = vld [vmem:[#allocation2 + $0xd0] sm:$0xff]
    %v820 = vld [vmem:[#allocation2 + $0xd8] sm:$0xff]
    %v821 = vld [vmem:[#allocation2 + $0xe0] sm:$0xff]
    %v822 = vld [vmem:[#allocation2 + $0xe8] sm:$0xff]
    %v823 = vld [vmem:[#allocation2 + $0xf0] sm:$0xff]
    %v824 = vld [vmem:[#allocation2 + $0xf8] sm:$0xff]
    %v825 = vld [vmem:[#allocation2 + $0x100] sm:$0xff]
    %v826 = vld [vmem:[#allocation2 + $0x108] sm:$0xff]
    %v827 = vld [vmem:[#allocation2 + $0x110] sm:$0xff]
    %v828 = vld [vmem:[#allocation2 + $0x118] sm:$0xff]
    %v831 = vunpack.c.l.s4 1983009808
    %v832 = vunpack.c.0.s8 %v831
    %v833 = vlaneseq
    %v834 = vshrl.u32 %v833, 7
    %v835 = vsub.s32 %v832, %v834
    %v836 = vrot.slane %v792, %v835
    %v837 = vcombine.high %v836, %v836
    %v840 = vsel %vm481, %v837, 0
    %842 = vmatprep.subr.bf16.mxu0 %v794
    %843 = vmatpush1.bf16.msra.mxu0 %v793
    %844 = vmatprep.subr.bf16.mxu0 %v798
    %845 = vmatpush1.bf16.msra.mxu0 %v797
    %846 = vmatprep.subr.bf16.mxu0 %v802
    %847 = vmatpush1.bf16.msra.mxu0 %v801
    %848 = vmatprep.subr.bf16.mxu0 %v806
    %849 = vmatpush1.bf16.msra.mxu0 %v805
    %850 = vmatprep.subr.bf16.mxu0 %v810
    %851 = vmatpush1.bf16.msra.mxu0 %v809
    %852 = vmatprep.subr.bf16.mxu0 %v814
    %853 = vmatpush1.bf16.msra.mxu0 %v813
    %854 = vmatprep.subr.bf16.mxu0 %v818
    %855 = vmatpush1.bf16.msra.mxu0 %v817
    %856 = vmatprep.subr.bf16.mxu0 %v822
    %857 = vmatpush1.bf16.msra.mxu0 %v821
    %858 = vmatprep.subr.bf16.mxu0 %v826
    %859 = vmatpush1.bf16.msra.mxu0 %v825
    %860 = vmatprep.subr.bf16.mxu0 0
    %861 = vmatpush1.bf16.msra.mxu0 0
    %862 = vmatprep.subr.bf16.mxu0 0
    %863 = vmatpush1.bf16.msra.mxu0 0
    %864 = vmatprep.subr.bf16.mxu0 0
    %865 = vmatpush1.bf16.msra.mxu0 0
    %866 = vmatprep.subr.bf16.mxu0 0
    %867 = vmatpush1.bf16.msra.mxu0 0
    %868 = vmatprep.subr.bf16.mxu0 0
    %869 = vmatpush1.bf16.msra.mxu0 0
    %870 = vmatprep.subr.bf16.mxu0 0
    %871 = vmatpush1.bf16.msra.mxu0 0
    %872 = vmatprep.subr.bf16.mxu0 0
    %873 = vmatpush1.bf16.msra.mxu0 0
    %874 = vmatprep.mubr.bf16.mxu0 %v840
    %875 = vmatmul.mubr.bf16.gmra.mrb[0].mxu0 %v836
    %v876 = vpop.f32.mrb[0].mxu0
    %v877 = vadd.f32 0.0, %v876
    %v878 = vpop.f32.mrb[0].mxu0
    %v879 = vadd.f32 0.0, %v878
    %v880 = vpop.f32.mrb[0].mxu0
    %v881 = vpop.f32.mrb[0].mxu0
    %882 = vdwg.mxu0
    %883 = vmatprep.subr.bf16.mxu0 %v796
    %884 = vmatpush1.bf16.msra.mxu0 %v795
    %885 = vmatprep.subr.bf16.mxu0 %v800
    %886 = vmatpush1.bf16.msra.mxu0 %v799
    %887 = vmatprep.subr.bf16.mxu0 %v804
    %888 = vmatpush1.bf16.msra.mxu0 %v803
    %889 = vmatprep.subr.bf16.mxu0 %v808
    %890 = vmatpush1.bf16.msra.mxu0 %v807
    %891 = vmatprep.subr.bf16.mxu0 %v812
    %892 = vmatpush1.bf16.msra.mxu0 %v811
    %893 = vmatprep.subr.bf16.mxu0 %v816
    %894 = vmatpush1.bf16.msra.mxu0 %v815
    %895 = vmatprep.subr.bf16.mxu0 %v820
    %896 = vmatpush1.bf16.msra.mxu0 %v819
    %897 = vmatprep.subr.bf16.mxu0 %v824
    %898 = vmatpush1.bf16.msra.mxu0 %v823
    %899 = vmatprep.subr.bf16.mxu0 %v828
    %900 = vmatpush1.bf16.msra.mxu0 %v827
    %901 = vmatprep.subr.bf16.mxu0 0
    %902 = vmatpush1.bf16.msra.mxu0 0
    %903 = vmatprep.subr.bf16.mxu0 0
    %904 = vmatpush1.bf16.msra.mxu0 0
    %905 = vmatprep.subr.bf16.mxu0 0
    %906 = vmatpush1.bf16.msra.mxu0 0
    %907 = vmatprep.subr.bf16.mxu0 0
    %908 = vmatpush1.bf16.msra.mxu0 0
    %909 = vmatprep.subr.bf16.mxu0 0
    %910 = vmatpush1.bf16.msra.mxu0 0
    %911 = vmatprep.subr.bf16.mxu0 0
    %912 = vmatpush1.bf16.msra.mxu0 0
    %913 = vmatprep.subr.bf16.mxu0 0
    %914 = vmatpush1.bf16.msra.mxu0 0
    %915 = vmatprep.mubr.bf16.mxu0 %v840
    %916 = vmatmul.mubr.bf16.gmra.mrb[0].mxu0 %v836
    %v917 = vpop.f32.mrb[0].mxu0
    %v918 = vadd.f32 0.0, %v917
    %v919 = vpop.f32.mrb[0].mxu0
    %v920 = vadd.f32 0.0, %v919
    %v921 = vpop.f32.mrb[0].mxu0
    %v922 = vpop.f32.mrb[0].mxu0
    %923 = vdwg.mxu0
    %924 = vset.pattern.permute.xlu0 2
    %925 = vperm.xlu0 %924, %v108
    %v926 = vpop.permute.xlu0 %925
    %v928 = vmul.f32 %v877, %v926
    %v929 = vmul.f32 %v879, %v926
    %v930 = vmul.f32 %v918, %v926
    %v931 = vmul.f32 %v920, %v926
    %932 = vset.pattern.permute.xlu0 3
    %933 = vperm.xlu0 %932, %v108
    %v934 = vpop.permute.xlu0 %933
    %v936 = vadd.f32 %v928, %v934
    %v937 = vadd.f32 %v929, %v934
    %v938 = vadd.f32 %v930, %v934
    %v939 = vadd.f32 %v931, %v934
    %v940 = vld [vmem:[#allocation3] sm:$0xff]
    %v942 = vcombine.high %v940, %v940
    %v944 = vsel %vm109, %v940, 0.0
    %v945 = vsel %vm109, %v942, 0.0
    %v946 = vadd.f32 %v944, %v945
    %947 = vadd.xlane.f32.xlu0 %v946
    %v948 = vpop.xlane.xlu0 %947
    %v949 = vrcp.pop 256.0
    %v950 = vmul.f32 %v948, %v949
    %v951 = vsel %vm109, %v936, 0.0
    %v952 = vsel %vm109, %v937, 0.0
    %v953 = vadd.f32 %v951, %v952
    %954 = vadd.xlane.f32.xlu0 %v953
    %v955 = vpop.xlane.xlu0 %954
    %v956 = vmul.f32 %v955, %v949
    %v957 = vadd.f32 %v950, %v956
    %v958 = vmax.f32 %v957, 0.0
    %v959 = vld [vmem:[%s4] sm:$0xf]
    %vm960 = vcmask 31744
    %v962 = vsel %vm960, %v959, 0
    %v965 = vsel %vm109, %v958, 0
    %967 = vmatprep.subr.mxu0 0.0
    %968 = vmatpush1.msra.mxu0 %v965
    %969 = vmatprep.subr.mxu0 0.0
    %970 = vmatpush1.msra.mxu0 0.0
    %971 = vmatprep.subr.mxu0 0.0
    %972 = vmatpush1.msra.mxu0 0.0
    %973 = vmatprep.subr.mxu0 0.0
    %974 = vmatpush1.msra.mxu0 0.0
    %975 = vmatprep.subr.mxu0 0.0
    %976 = vmatpush1.msra.mxu0 0.0
    %977 = vmatprep.subr.mxu0 0.0
    %978 = vmatpush1.msra.mxu0 0.0
    %979 = vmatprep.subr.mxu0 0.0
    %980 = vmatpush1.msra.mxu0 0.0
    %981 = vmatprep.subr.mxu0 0.0
    %982 = vmatpush1.msra.mxu0 0.0
    %983 = vmatprep.subr.mxu0 0.0
    %984 = vmatpush1.msra.mxu0 0.0
    %985 = vmatprep.subr.mxu0 0.0
    %986 = vmatpush1.msra.mxu0 0.0
    %987 = vmatprep.subr.mxu0 0.0
    %988 = vmatpush1.msra.mxu0 0.0
    %989 = vmatprep.subr.mxu0 0.0
    %990 = vmatpush1.msra.mxu0 0.0
    %991 = vmatprep.subr.mxu0 0.0
    %992 = vmatpush1.msra.mxu0 0.0
    %993 = vmatprep.subr.mxu0 0.0
    %994 = vmatpush1.msra.mxu0 0.0
    %995 = vmatprep.subr.mxu0 0.0
    %996 = vmatpush1.msra.mxu0 0.0
    %997 = vmatprep.subr.mxu0 0.0
    %998 = vmatpush1.msra.mxu0 0.0
    %999 = vmatprep.subr.mxu0 0.0
    %1000 = vmatpush1.msra.mxu0 0.0
    %1001 = vmatprep.subr.mxu0 0.0
    %1002 = vmatpush1.msra.mxu0 0.0
    %1003 = vmatprep.subr.mxu0 0.0
    %1004 = vmatpush1.msra.mxu0 0.0
    %1005 = vmatprep.subr.mxu0 0.0
    %1006 = vmatpush1.msra.mxu0 0.0
    %1007 = vmatprep.subr.mxu0 0.0
    %1008 = vmatpush1.msra.mxu0 0.0
    %1009 = vmatprep.subr.mxu0 0.0
    %1010 = vmatpush1.msra.mxu0 0.0
    %1011 = vmatprep.subr.mxu0 0.0
    %1012 = vmatpush1.msra.mxu0 0.0
    %1013 = vmatprep.subr.mxu0 0.0
    %1014 = vmatpush1.msra.mxu0 0.0
    %1015 = vmatprep.subr.mxu0 0.0
    %1016 = vmatpush1.msra.mxu0 0.0
    %1017 = vmatprep.subr.mxu0 0.0
    %1018 = vmatpush1.msra.mxu0 0.0
    %1019 = vmatprep.subr.mxu0 0.0
    %1020 = vmatpush1.msra.mxu0 0.0
    %1021 = vmatprep.subr.mxu0 0.0
    %1022 = vmatpush1.msra.mxu0 0.0
    %1023 = vmatprep.subr.mxu0 0.0
    %1024 = vmatpush1.msra.mxu0 0.0
    %1025 = vmatprep.subr.mxu0 0.0
    %1026 = vmatpush1.msra.mxu0 0.0
    %1027 = vmatprep.subr.mxu0 0.0
    %1028 = vmatpush1.msra.mxu0 0.0
    %1029 = vmatprep.subr.mxu0 0.0
    %1030 = vmatpush1.msra.mxu0 0.0
    %1031 = vmatprep.mubr.f32.mxu0 0.0
    %1032 = vmatmul.mubr.f32.gmra.mrb[0].mxu0 %v962
    %v1033 = vpop.f32.mrb[0].mxu0
    %v1034 = vadd.f32 0.0, %v1033
    %v1035 = vpop.f32.mrb[0].mxu0
    %1036 = vdwg.mxu0
    %v1037 = vxor.u32 %v1034, 2147483648
    %v1038 = vmul.f32 %v1037, 1.442695
    %v1039 = vpow.pop %v1038
    %v1040 = vadd.f32 %v1039, 1.0
    %v1041 = vrcp.pop %v1040
    %v1042 = vmul.f32 1.0, %v1041
    %v1043 = vld [vmem:[%s5] sm:$0xf]
    %1045 = vset.pattern.permute.xlu0 0
    %1046 = vperm.xlu0 %1045, %v1034
    %v1047 = vpop.permute.xlu0 %1046
    %v1049 = vmul.f32 %v1047, %v1043
    %v1050 = vsel %vm109, %v1049, 0.0
    %v1051 = vrot.slane %v1050, 4
    %v1052 = vadd.f32 %v1050, %v1051
    %v1053 = vrot.slane %v1052, 2
    %v1054 = vadd.f32 %v1052, %v1053
    %v1055 = vrot.slane %v1054, 1
    %v1056 = vadd.f32 %v1054, %v1055
    %1058 = vset.pattern.permute.xlu0 0
    %1059 = vperm.xlu0 %1058, %v1042
    %v1060 = vpop.permute.xlu0 %1059
    %v1062 = vunpack.c.l.s4 839922192
    %v1063 = vunpack.c.0.s8 %v1062
    %v1064 = vlaneseq
    %v1065 = vshrl.u32 %v1064, 7
    %v1066 = vsub.s32 %v1063, %v1065
    %v1067 = vrot.slane %v1060, %v1066
    %v1069 = vmul.f32 %v940, %v1067
    %v1071 = vcombine.high %v1069, %v1069
    %v1073 = vadd.f32 %v936, %v1069
    %v1074 = vadd.f32 %v937, %v1071
    %v1075 = vmax.f32 %v1073, 0.0
    %v1076 = vmax.f32 %v1074, 0.0
    %v1079 = vcombine.low %v1075, %v1076
    %1081 = vst [vmem:[#allocation8] sm:$0xff] %v1079
    %1082 = vst [vmem:[#allocation9] sm:$0x1] %v1056
    %v1083 = vld [vmem:[%s100] sm:$0xff]
    %v1085 = vcombine.high %v1083, %v1083
    %v1087 = vsel %vm109, %v1083, 0.0
    %v1088 = vsel %vm109, %v1085, 0.0
    %v1089 = vadd.f32 %v1087, %v1088
    %1090 = vadd.xlane.f32.xlu0 %v1089
    %v1091 = vpop.xlane.xlu0 %1090
    %v1092 = vmul.f32 %v1091, %v949
    %v1093 = vsel %vm109, %v938, 0.0
    %v1094 = vsel %vm109, %v939, 0.0
    %v1095 = vadd.f32 %v1093, %v1094
    %1096 = vadd.xlane.f32.xlu0 %v1095
    %v1097 = vpop.xlane.xlu0 %1096
    %v1098 = vmul.f32 %v1097, %v949
    %v1099 = vadd.f32 %v1092, %v1098
    %v1100 = vmax.f32 %v1099, 0.0
    %v1101 = vld [vmem:[%s4] sm:$0xf]
    %v1103 = vsel %vm960, %v1101, 0
    %v1106 = vsel %vm109, %v1100, 0
    %1108 = vmatprep.subr.mxu0 0.0
    %1109 = vmatpush1.msra.mxu0 %v1106
    %1110 = vmatprep.subr.mxu0 0.0
    %1111 = vmatpush1.msra.mxu0 0.0
    %1112 = vmatprep.subr.mxu0 0.0
    %1113 = vmatpush1.msra.mxu0 0.0
    %1114 = vmatprep.subr.mxu0 0.0
    %1115 = vmatpush1.msra.mxu0 0.0
    %1116 = vmatprep.subr.mxu0 0.0
    %1117 = vmatpush1.msra.mxu0 0.0
    %1118 = vmatprep.subr.mxu0 0.0
    %1119 = vmatpush1.msra.mxu0 0.0
    %1120 = vmatprep.subr.mxu0 0.0
    %1121 = vmatpush1.msra.mxu0 0.0
    %1122 = vmatprep.subr.mxu0 0.0
    %1123 = vmatpush1.msra.mxu0 0.0
    %1124 = vmatprep.subr.mxu0 0.0
    %1125 = vmatpush1.msra.mxu0 0.0
    %1126 = vmatprep.subr.mxu0 0.0
    %1127 = vmatpush1.msra.mxu0 0.0
    %1128 = vmatprep.subr.mxu0 0.0
    %1129 = vmatpush1.msra.mxu0 0.0
    %1130 = vmatprep.subr.mxu0 0.0
    %1131 = vmatpush1.msra.mxu0 0.0
    %1132 = vmatprep.subr.mxu0 0.0
    %1133 = vmatpush1.msra.mxu0 0.0
    %1134 = vmatprep.subr.mxu0 0.0
    %1135 = vmatpush1.msra.mxu0 0.0
    %1136 = vmatprep.subr.mxu0 0.0
    %1137 = vmatpush1.msra.mxu0 0.0
    %1138 = vmatprep.subr.mxu0 0.0
    %1139 = vmatpush1.msra.mxu0 0.0
    %1140 = vmatprep.subr.mxu0 0.0
    %1141 = vmatpush1.msra.mxu0 0.0
    %1142 = vmatprep.subr.mxu0 0.0
    %1143 = vmatpush1.msra.mxu0 0.0
    %1144 = vmatprep.subr.mxu0 0.0
    %1145 = vmatpush1.msra.mxu0 0.0
    %1146 = vmatprep.subr.mxu0 0.0
    %1147 = vmatpush1.msra.mxu0 0.0
    %1148 = vmatprep.subr.mxu0 0.0
    %1149 = vmatpush1.msra.mxu0 0.0
    %1150 = vmatprep.subr.mxu0 0.0
    %1151 = vmatpush1.msra.mxu0 0.0
    %1152 = vmatprep.subr.mxu0 0.0
    %1153 = vmatpush1.msra.mxu0 0.0
    %1154 = vmatprep.subr.mxu0 0.0
    %1155 = vmatpush1.msra.mxu0 0.0
    %1156 = vmatprep.subr.mxu0 0.0
    %1157 = vmatpush1.msra.mxu0 0.0
    %1158 = vmatprep.subr.mxu0 0.0
    %1159 = vmatpush1.msra.mxu0 0.0
    %1160 = vmatprep.subr.mxu0 0.0
    %1161 = vmatpush1.msra.mxu0 0.0
    %1162 = vmatprep.subr.mxu0 0.0
    %1163 = vmatpush1.msra.mxu0 0.0
    %1164 = vmatprep.subr.mxu0 0.0
    %1165 = vmatpush1.msra.mxu0 0.0
    %1166 = vmatprep.subr.mxu0 0.0
    %1167 = vmatpush1.msra.mxu0 0.0
    %1168 = vmatprep.subr.mxu0 0.0
    %1169 = vmatpush1.msra.mxu0 0.0
    %1170 = vmatprep.subr.mxu0 0.0
    %1171 = vmatpush1.msra.mxu0 0.0
    %1172 = vmatprep.mubr.f32.mxu0 0.0
    %1173 = vmatmul.mubr.f32.gmra.mrb[0].mxu0 %v1103
    %v1174 = vpop.f32.mrb[0].mxu0
    %v1175 = vadd.f32 0.0, %v1174
    %v1176 = vpop.f32.mrb[0].mxu0
    %1177 = vdwg.mxu0
    %v1178 = vxor.u32 %v1175, 2147483648
    %v1179 = vmul.f32 %v1178, 1.442695
    %v1180 = vpow.pop %v1179
    %v1181 = vadd.f32 %v1180, 1.0
    %v1182 = vrcp.pop %v1181
    %v1183 = vmul.f32 1.0, %v1182
    %v1184 = vld [vmem:[%s5] sm:$0xf]
    %1186 = vset.pattern.permute.xlu0 0
    %1187 = vperm.xlu0 %1186, %v1175
    %v1188 = vpop.permute.xlu0 %1187
    %v1190 = vmul.f32 %v1188, %v1184
    %v1191 = vsel %vm109, %v1190, 0.0
    %v1192 = vrot.slane %v1191, 4
    %v1193 = vadd.f32 %v1191, %v1192
    %v1194 = vrot.slane %v1193, 2
    %v1195 = vadd.f32 %v1193, %v1194
    %v1196 = vrot.slane %v1195, 1
    %v1197 = vadd.f32 %v1195, %v1196
    %1199 = vset.pattern.permute.xlu0 0
    %1200 = vperm.xlu0 %1199, %v1183
    %v1201 = vpop.permute.xlu0 %1200
    %v1203 = vunpack.c.l.s4 839922192
    %v1204 = vunpack.c.0.s8 %v1203
    %v1205 = vlaneseq
    %v1206 = vshrl.u32 %v1205, 7
    %v1207 = vsub.s32 %v1204, %v1206
    %v1208 = vrot.slane %v1201, %v1207
    %v1210 = vmul.f32 %v1083, %v1208
    %v1212 = vcombine.high %v1210, %v1210
    %v1214 = vadd.f32 %v938, %v1210
    %v1215 = vadd.f32 %v939, %v1212
    %v1216 = vmax.f32 %v1214, 0.0
    %v1217 = vmax.f32 %v1215, 0.0
    %v1220 = vcombine.low %v1216, %v1217
    %s1222 = scalar_lea.vmem [#allocation8], 8
    %1223 = vst [vmem:[%s1222] sm:$0xff] %v1220
    %s1224 = scalar_lea.vmem [#allocation9], 1
    %1225 = vst [vmem:[%s1224] sm:$0x1] %v1197
    // Predicated region
    $region34: #{tpu_custom_call.1} parent=1 // pred_check
      _
    $region35: #{tpu_custom_call.1} parent=1 // pred_check_branch
      %1227 = sbr.rel (0) target = $region37
    $region36: #{tpu_custom_call.1} parent=1 // pred_region
      %s1229 = ssub.s32 256, 256
      %1230 = vsyncadd [#allocation5], %s1229
      %s1231 = sshll.u32 [#allocation8], 4
      %s1232 = int_to_ptr.vmem [resolvable:$true] %s1231
      %1237 = dma.vmem_to_hbm [thread:$0]  %s1232, 256, %s6, [#allocation5], 128, 128, 8
    $region37: #{tpu_custom_call.1} parent=1 // pred_fallthru
      _
    // Predicated region
    $region38: #{tpu_custom_call.1} parent=1 // pred_check
      _
    $region39: #{tpu_custom_call.1} parent=1 // pred_check_branch
      %1239 = sbr.rel (0) target = $region41
    $region40: #{tpu_custom_call.1} parent=1 // pred_region
      %s1241 = ssub.s32 32, 32
      %1242 = vsyncadd [#allocation10], %s1241
      %s1243 = sshll.u32 [#allocation9], 4
      %s1244 = int_to_ptr.vmem [resolvable:$true] %s1243
      %1249 = dma.vmem_to_hbm [thread:$0]  %s1244, 32, %s7, [#allocation10], 16, 16, 1
    $region41: #{tpu_custom_call.1} parent=1 // pred_fallthru
      _
    // Predicated region
    $region42: #{tpu_custom_call.1} parent=1 // pred_check
      _
    $region43: #{tpu_custom_call.1} parent=1 // pred_check_branch
      %1251 = sbr.rel (0) target = $region45
    $region44: #{tpu_custom_call.1} parent=1 // pred_region
      %1252 = dma.done [#allocation5], 256
    $region45: #{tpu_custom_call.1} parent=1 // pred_fallthru
      _
    // Predicated region
    $region46: #{tpu_custom_call.1} parent=1 // pred_check
      _
    $region47: #{tpu_custom_call.1} parent=1 // pred_check_branch
      %1254 = sbr.rel (0) target = $region49
    $region48: #{tpu_custom_call.1} parent=1 // pred_region
      %1255 = dma.done [#allocation10], 32
    $region49: #{tpu_custom_call.1} parent=1 // pred_fallthru
      _
    %1256 = vsyncpa [#allocation4], 1
    %1257 = vsyncpa [#allocation7], 1
    %1258 = vsyncpa [#allocation5], 1
    %1259 = vsyncpa [#allocation10], 1

</llo_original>
